<compile_context>
chip_gen: v7x
topology: tpu7x:2x2x1
jax: 0.10.0
libtpu: 0.0.40
codegen_flags: <defaults>
</compile_context>

<pallas_src>
import math

import jax
import jax.numpy as jnp
from jax import lax
from jax.experimental import pallas as pl
from jax.experimental.pallas import tpu as pltpu


# ---------------- configuration (small, synthetic) ----------------
B = 2           # batch
T = 8           # n_ctx / sequence length
C = 32          # n_embd (hidden size)
H = 4           # n_head
D = C // H      # head dim
INNER = 4 * C   # MLP inner dim
EPS = 1e-5      # layer_norm_epsilon
SCALE = True    # Attention(scale=True)
MASKED_BIAS = -10000.0


def _layer_norm(x, g, b):
    mu = jnp.mean(x, axis=-1, keepdims=True)
    var = jnp.mean((x - mu) ** 2, axis=-1, keepdims=True)
    return (x - mu) * lax.rsqrt(var + EPS) * g + b


def _gelu_new(x):
    # GPT-2 "gelu_new": 0.5*x*(1+tanh(sqrt(2/pi)*(x+0.044715*x^3)))
    return 0.5 * x * (1.0 + jnp.tanh(
        math.sqrt(2.0 / math.pi) * (x + 0.044715 * x * x * x)))


def block_kernel(x_ref,
                 ln1_g_ref, ln1_b_ref,
                 wqkv_ref, bqkv_ref,        # (C, 3C) bf16 / (1, 3C) f32
                 wproj_ref, bproj_ref,      # (C, C)  bf16 / (1, C)  f32
                 ln2_g_ref, ln2_b_ref,
                 wfc_ref, bfc_ref,          # (C, INNER) bf16 / (1, INNER) f32
                 wfc2_ref, bfc2_ref,        # (INNER, C) bf16 / (1, C)     f32
                 out_ref,
                 oheads_ref):               # (T, C) bf16 VMEM scratch
    x = x_ref[...].astype(jnp.float32)                          # (T, C)

    # ---- LN1 (f32) ----
    h_ln1 = _layer_norm(x, ln1_g_ref[...], ln1_b_ref[...])

    # ---- fused QKV projection: one lane-dense matmul (bf16 operands) ----
    qkv = jnp.dot(h_ln1.astype(jnp.bfloat16), wqkv_ref[...],
                  preferred_element_type=jnp.float32) + bqkv_ref[...]   # (T, 3C)

    # ---- local per-sequence causal mask ----
    row = lax.broadcasted_iota(jnp.int32, (T, T), 0)
    col = lax.broadcasted_iota(jnp.int32, (T, T), 1)
    causal = row >= col

    # ---- per-head attention; o_h written at static lane offset h*D ----
    for h in range(H):                                           # static unroll, H=4
        q = qkv[:, h * D:(h + 1) * D]            # 1/sqrt(D) folded into wq/bq
        k = qkv[:, C + h * D:C + (h + 1) * D]
        v = qkv[:, 2 * C + h * D:2 * C + (h + 1) * D]

        s = jnp.dot(q.astype(jnp.bfloat16), k.astype(jnp.bfloat16).T,
                    preferred_element_type=jnp.float32)          # (T, T)
        s = jnp.where(causal, s, jnp.float32(MASKED_BIAS))
        s = s - jnp.max(s, axis=-1, keepdims=True)
        p = jnp.exp(s)                                           # f32 softmax
        p = p * pl.reciprocal(jnp.sum(p, axis=-1, keepdims=True), approx=True)

        o = jnp.dot(p.astype(jnp.bfloat16), v.astype(jnp.bfloat16),
                    preferred_element_type=jnp.float32)          # (T, D)
        oheads_ref[:, h * D:(h + 1) * D] = o.astype(jnp.bfloat16)

    # ---- merge_heads (already laid out) + deep-K c_proj ----
    a = jnp.dot(oheads_ref[...], wproj_ref[...],
                preferred_element_type=jnp.float32) + bproj_ref[...]    # (T, C)

    h1 = x + a                                                   # residual 1

    # ---- LN2 + MLP + residual ----
    h_ln2 = _layer_norm(h1, ln2_g_ref[...], ln2_b_ref[...])
    ff = jnp.dot(h_ln2.astype(jnp.bfloat16), wfc_ref[...],
                 preferred_element_type=jnp.float32) + bfc_ref[...]     # (T, INNER)
    ff = _gelu_new(ff)                                           # f32 elementwise
    ff = jnp.dot(ff.astype(jnp.bfloat16), wfc2_ref[...],
                 preferred_element_type=jnp.float32) + bfc2_ref[...]    # (T, C)

    out_ref[...] = (h1 + ff).astype(out_ref.dtype)


def _resident_spec(shape):
    """Full-array block pinned to a constant index -> stays in VMEM across grid."""
    zeros = (0,) * len(shape)
    return pl.BlockSpec(shape, lambda b: zeros)


def block_forward(x, params):
    """x: (B, T, C) float32 -> (B, T, C) float32."""
    (ln1_g, ln1_b, wqkv, bqkv, wproj, bproj,
     ln2_g, ln2_b, wfc, bfc, wfc2, bfc2) = params

    # Fold the 1/sqrt(D) attention scale into the q slice of the fused QKV
    # weight & bias (free, done once in the wrapper).
    if SCALE:
        inv_sqrt_d = 1.0 / math.sqrt(D)
        wqkv = wqkv.at[:, :C].multiply(inv_sqrt_d)
        bqkv = bqkv.at[:, :C].multiply(inv_sqrt_d)

    # Matmul weights in bf16 (MXU-native); biases / LN params stay f32.
    wqkv_b = wqkv.astype(jnp.bfloat16)
    wproj_b = wproj.astype(jnp.bfloat16)
    wfc_b = wfc.astype(jnp.bfloat16)
    wfc2_b = wfc2.astype(jnp.bfloat16)

    out = pl.pallas_call(
        block_kernel,
        out_shape=jax.ShapeDtypeStruct((B, T, C), x.dtype),
        grid_spec=pltpu.PrefetchScalarGridSpec(
            num_scalar_prefetch=0,
            grid=(B,),
            in_specs=[
                pl.BlockSpec((None, T, C), lambda b: (b, 0, 0)),   # x: per-batch tile
                _resident_spec(ln1_g.shape), _resident_spec(ln1_b.shape),
                _resident_spec(wqkv_b.shape), _resident_spec(bqkv.shape),
                _resident_spec(wproj_b.shape), _resident_spec(bproj.shape),
                _resident_spec(ln2_g.shape), _resident_spec(ln2_b.shape),
                _resident_spec(wfc_b.shape), _resident_spec(bfc.shape),
                _resident_spec(wfc2_b.shape), _resident_spec(bfc2.shape),
            ],
            out_specs=pl.BlockSpec((None, T, C), lambda b: (b, 0, 0)),
            scratch_shapes=[pltpu.VMEM((T, C), jnp.bfloat16)],     # merged head outputs
        ),
        compiler_params=pltpu.CompilerParams(
            dimension_semantics=("parallel",),
            vmem_limit_bytes=64 * 1024 * 1024),
    )(x, ln1_g, ln1_b, wqkv_b, bqkv, wproj_b, bproj,
      ln2_g, ln2_b, wfc_b, bfc, wfc2_b, bfc2)
    return out


# ---------------- pure-JAX reference (faithful per-batch, f32) ----------------
def block_reference(x, params):
    (ln1_g, ln1_b, wqkv, bqkv, wproj, bproj,
     ln2_g, ln2_b, wfc, bfc, wfc2, bfc2) = params
    h_ln1 = _layer_norm(x, ln1_g, ln1_b)
    qkv = jnp.einsum('btc,cd->btd', h_ln1, wqkv) + bqkv
    q, k, v = jnp.split(qkv, 3, axis=-1)
    q = q.reshape(B, T, H, D).transpose(0, 2, 1, 3)
    k = k.reshape(B, T, H, D).transpose(0, 2, 1, 3)
    v = v.reshape(B, T, H, D).transpose(0, 2, 1, 3)
    w = jnp.einsum('bhqd,bhkd->bhqk', q, k)
    if SCALE:
        w = w / math.sqrt(D)
    mask = jnp.tril(jnp.ones((T, T), dtype=bool))
    w = jnp.where(mask[None, None], w, MASKED_BIAS)
    p = jax.nn.softmax(w, axis=-1)
    a = jnp.einsum('bhqk,bhkd->bhqd', p, v).transpose(0, 2, 1, 3).reshape(B, T, C)
    a = jnp.einsum('btc,cd->btd', a, wproj) + bproj
    h1 = x + a
    h_ln2 = _layer_norm(h1, ln2_g, ln2_b)
    ff = _gelu_new(jnp.einsum('btc,cd->btd', h_ln2, wfc) + bfc)
    ff = jnp.einsum('bti,ic->btc', ff, wfc2) + bfc2
    return h1 + ff


def make_params(key):
    ks = jax.random.split(key, 4)
    std = 0.02
    ln1_g = jnp.ones((1, C), jnp.float32)
    ln1_b = jnp.zeros((1, C), jnp.float32)
    ln2_g = jnp.ones((1, C), jnp.float32)
    ln2_b = jnp.zeros((1, C), jnp.float32)
    wqkv = std * jax.random.normal(ks[0], (C, 3 * C), jnp.float32)
    bqkv = jnp.zeros((1, 3 * C), jnp.float32)
    wproj = std * jax.random.normal(ks[1], (C, C), jnp.float32)
    bproj = jnp.zeros((1, C), jnp.float32)
    wfc = std * jax.random.normal(ks[2], (C, INNER), jnp.float32)
    bfc = jnp.zeros((1, INNER), jnp.float32)
    wfc2 = std * jax.random.normal(ks[3], (INNER, C), jnp.float32)
    bfc2 = jnp.zeros((1, C), jnp.float32)
    return (ln1_g, ln1_b, wqkv, bqkv, wproj, bproj,
            ln2_g, ln2_b, wfc, bfc, wfc2, bfc2)


if __name__ == "__main__":
    key = jax.random.PRNGKey(0)
    kx, kp = jax.random.split(key)
    x = jax.random.normal(kx, (B, T, C), jnp.float32)
    params = make_params(kp)

    out = block_forward(x, params)
    out = jax.block_until_ready(out)

    ref = block_reference(x, params)
    assert out.shape == (B, T, C)
    # tolerance: bf16 matmul operands (~0.2% rel) + EUP approx reciprocal in
    # the softmax; the f32 residual stream keeps absolute error to a few e-4.
    assert jnp.allclose(out, ref, rtol=2e-3, atol=2e-3), (
        float(jnp.max(jnp.abs(out - ref))))
    print("KERNEL_OK")
</pallas_src>

<mosaic_0001>
module attributes {stable_mosaic.version = 11 : i64} {
  func.func @block_kernel(%arg0: i32, %arg1: memref<1x8x32xf32, #tpu.memory_space<vmem>>, %arg2: memref<1x32xf32, #tpu.memory_space<vmem>>, %arg3: memref<1x32xf32, #tpu.memory_space<vmem>>, %arg4: memref<32x96xbf16, #tpu.memory_space<vmem>>, %arg5: memref<1x96xf32, #tpu.memory_space<vmem>>, %arg6: memref<32x32xbf16, #tpu.memory_space<vmem>>, %arg7: memref<1x32xf32, #tpu.memory_space<vmem>>, %arg8: memref<1x32xf32, #tpu.memory_space<vmem>>, %arg9: memref<1x32xf32, #tpu.memory_space<vmem>>, %arg10: memref<32x128xbf16, #tpu.memory_space<vmem>>, %arg11: memref<1x128xf32, #tpu.memory_space<vmem>>, %arg12: memref<128x32xbf16, #tpu.memory_space<vmem>>, %arg13: memref<1x32xf32, #tpu.memory_space<vmem>>, %arg14: memref<1x8x32xf32, #tpu.memory_space<vmem>>, %arg15: memref<8x32xbf16, #tpu.memory_space<vmem>>) attributes {dimension_semantics = [#tpu.dimension_semantics<parallel>], iteration_bounds = array<i64: 2>, scalar_prefetch = 0 : i64, scratch_operands = 1 : i64, tpu.core_type = #tpu.core_type<tc>, window_params = [{transform_indices = @transform_0, window_bounds = array<i64: 1, 8, 32>}, {pipeline_mode = #tpu.pipeline_mode<synchronous>, transform_indices = @transform_1, window_bounds = array<i64: 1, 32>}, {pipeline_mode = #tpu.pipeline_mode<synchronous>, transform_indices = @transform_2, window_bounds = array<i64: 1, 32>}, {pipeline_mode = #tpu.pipeline_mode<synchronous>, transform_indices = @transform_3, window_bounds = array<i64: 32, 96>}, {pipeline_mode = #tpu.pipeline_mode<synchronous>, transform_indices = @transform_4, window_bounds = array<i64: 1, 96>}, {pipeline_mode = #tpu.pipeline_mode<synchronous>, transform_indices = @transform_5, window_bounds = array<i64: 32, 32>}, {pipeline_mode = #tpu.pipeline_mode<synchronous>, transform_indices = @transform_6, window_bounds = array<i64: 1, 32>}, {pipeline_mode = #tpu.pipeline_mode<synchronous>, transform_indices = @transform_7, window_bounds = array<i64: 1, 32>}, {pipeline_mode = #tpu.pipeline_mode<synchronous>, transform_indices = @transform_8, window_bounds = array<i64: 1, 32>}, {pipeline_mode = #tpu.pipeline_mode<synchronous>, transform_indices = @transform_9, window_bounds = array<i64: 32, 128>}, {pipeline_mode = #tpu.pipeline_mode<synchronous>, transform_indices = @transform_10, window_bounds = array<i64: 1, 128>}, {pipeline_mode = #tpu.pipeline_mode<synchronous>, transform_indices = @transform_11, window_bounds = array<i64: 128, 32>}, {pipeline_mode = #tpu.pipeline_mode<synchronous>, transform_indices = @transform_12, window_bounds = array<i64: 1, 32>}, {transform_indices = @transform_13, window_bounds = array<i64: 1, 8, 32>}]} {
    %c0 = arith.constant 0 : index
    %c0_0 = arith.constant 0 : index
    %c0_1 = arith.constant 0 : index
    %0 = vector.load %arg1[%c0, %c0_0, %c0_1] : memref<1x8x32xf32, #tpu.memory_space<vmem>>, vector<1x8x32xf32>
    %1 = vector.shape_cast %0 : vector<1x8x32xf32> to vector<8x32xf32>
    %c0_2 = arith.constant 0 : index
    %c0_3 = arith.constant 0 : index
    %2 = vector.load %arg2[%c0_2, %c0_3] : memref<1x32xf32, #tpu.memory_space<vmem>>, vector<1x32xf32>
    %c0_4 = arith.constant 0 : index
    %c0_5 = arith.constant 0 : index
    %3 = vector.load %arg3[%c0_4, %c0_5] : memref<1x32xf32, #tpu.memory_space<vmem>>, vector<1x32xf32>
    %cst = arith.constant dense<0.000000e+00> : vector<8xf32>
    %4 = vector.multi_reduction <add>, %1, %cst [1] : vector<8x32xf32> to vector<8xf32>
    %5 = vector.shape_cast %4 : vector<8xf32> to vector<8x1xf32>
    %cst_6 = arith.constant 3.200000e+01 : f32
    %6 = vector.broadcast %cst_6 : f32 to vector<8x1xf32>
    %7 = arith.divf %5, %6 : vector<8x1xf32>
    %8 = vector.broadcast %7 : vector<8x1xf32> to vector<8x32xf32>
    %9 = arith.subf %1, %8 : vector<8x32xf32>
    %10 = arith.mulf %9, %9 : vector<8x32xf32>
    %cst_7 = arith.constant dense<0.000000e+00> : vector<8xf32>
    %11 = vector.multi_reduction <add>, %10, %cst_7 [1] : vector<8x32xf32> to vector<8xf32>
    %12 = vector.shape_cast %11 : vector<8xf32> to vector<8x1xf32>
    %cst_8 = arith.constant 3.200000e+01 : f32
    %13 = vector.broadcast %cst_8 : f32 to vector<8x1xf32>
    %14 = arith.divf %12, %13 : vector<8x1xf32>
    %15 = vector.broadcast %7 : vector<8x1xf32> to vector<8x32xf32>
    %16 = arith.subf %1, %15 : vector<8x32xf32>
    %cst_9 = arith.constant 9.99999974E-6 : f32
    %17 = vector.broadcast %cst_9 : f32 to vector<8x1xf32>
    %18 = arith.addf %14, %17 : vector<8x1xf32>
    %19 = math.rsqrt %18 : vector<8x1xf32>
    %20 = vector.broadcast %19 : vector<8x1xf32> to vector<8x32xf32>
    %21 = arith.mulf %16, %20 : vector<8x32xf32>
    %22 = vector.broadcast %2 : vector<1x32xf32> to vector<8x32xf32>
    %23 = arith.mulf %21, %22 : vector<8x32xf32>
    %24 = vector.broadcast %3 : vector<1x32xf32> to vector<8x32xf32>
    %25 = arith.addf %23, %24 : vector<8x32xf32>
    %26 = arith.truncf %25 : vector<8x32xf32> to vector<8x32xbf16>
    %c0_10 = arith.constant 0 : index
    %c0_11 = arith.constant 0 : index
    %27 = vector.load %arg4[%c0_10, %c0_11] : memref<32x96xbf16, #tpu.memory_space<vmem>>, vector<32x96xbf16>
    %cst_12 = arith.constant dense<0.000000e+00> : vector<8x96xf32>
    %28 = tpu.matmul %26, %27, %cst_12 {dimension_numbers = #tpu.dot_dimension_numbers<[1], [0], [0], [1], [0, 0, 1, 1], [], []>} : vector<8x32xbf16>, vector<32x96xbf16>, vector<8x96xf32> -> vector<8x96xf32>
    %c0_13 = arith.constant 0 : index
    %c0_14 = arith.constant 0 : index
    %29 = vector.load %arg5[%c0_13, %c0_14] : memref<1x96xf32, #tpu.memory_space<vmem>>, vector<1x96xf32>
    %30 = vector.broadcast %29 : vector<1x96xf32> to vector<8x96xf32>
    %31 = arith.addf %28, %30 : vector<8x96xf32>
    %32 = tpu.iota {dimensions = array<i32: 0>} : vector<8x8xi32>
    %33 = tpu.iota {dimensions = array<i32: 1>} : vector<8x8xi32>
    %34 = arith.cmpi sge, %32, %33 : vector<8x8xi32>
    %35 = vector.extract_strided_slice %31 {offsets = [0, 0], sizes = [8, 8], strides = [1, 1]} : vector<8x96xf32> to vector<8x8xf32>
    %36 = vector.extract_strided_slice %31 {offsets = [0, 32], sizes = [8, 8], strides = [1, 1]} : vector<8x96xf32> to vector<8x8xf32>
    %37 = vector.extract_strided_slice %31 {offsets = [0, 64], sizes = [8, 8], strides = [1, 1]} : vector<8x96xf32> to vector<8x8xf32>
    %38 = arith.truncf %35 : vector<8x8xf32> to vector<8x8xbf16>
    %39 = arith.truncf %36 : vector<8x8xf32> to vector<8x8xbf16>
    %40 = tpu.transpose %39, [1, 0] : vector<8x8xbf16> -> vector<8x8xbf16>
    %cst_15 = arith.constant dense<0.000000e+00> : vector<8x8xf32>
    %41 = tpu.matmul %38, %40, %cst_15 {dimension_numbers = #tpu.dot_dimension_numbers<[1], [0], [0], [1], [0, 0, 1, 1], [], []>} : vector<8x8xbf16>, vector<8x8xbf16>, vector<8x8xf32> -> vector<8x8xf32>
    %cst_16 = arith.constant -1.000000e+04 : f32
    %42 = vector.broadcast %cst_16 : f32 to vector<8x8xf32>
    %43 = arith.select %34, %41, %42 : vector<8x8xi1>, vector<8x8xf32>
    %cst_17 = arith.constant dense<0xFF800000> : vector<8xf32>
    %44 = vector.multi_reduction <maximumf>, %43, %cst_17 [1] : vector<8x8xf32> to vector<8xf32>
    %45 = vector.shape_cast %44 : vector<8xf32> to vector<8x1xf32>
    %46 = vector.broadcast %45 : vector<8x1xf32> to vector<8x8xf32>
    %47 = arith.subf %43, %46 : vector<8x8xf32>
    %48 = math.exp %47 : vector<8x8xf32>
    %cst_18 = arith.constant dense<0.000000e+00> : vector<8xf32>
    %49 = vector.multi_reduction <add>, %48, %cst_18 [1] : vector<8x8xf32> to vector<8xf32>
    %50 = vector.shape_cast %49 : vector<8xf32> to vector<8x1xf32>
    %51 = tpu.reciprocal %50 {approx = true} : vector<8x1xf32> -> vector<8x1xf32>
    %52 = vector.broadcast %51 : vector<8x1xf32> to vector<8x8xf32>
    %53 = arith.mulf %48, %52 : vector<8x8xf32>
    %54 = arith.truncf %53 : vector<8x8xf32> to vector<8x8xbf16>
    %55 = arith.truncf %37 : vector<8x8xf32> to vector<8x8xbf16>
    %cst_19 = arith.constant dense<0.000000e+00> : vector<8x8xf32>
    %56 = tpu.matmul %54, %55, %cst_19 {dimension_numbers = #tpu.dot_dimension_numbers<[1], [0], [0], [1], [0, 0, 1, 1], [], []>} : vector<8x8xbf16>, vector<8x8xbf16>, vector<8x8xf32> -> vector<8x8xf32>
    %57 = arith.truncf %56 : vector<8x8xf32> to vector<8x8xbf16>
    %c0_20 = arith.constant 0 : index
    %c0_21 = arith.constant 0 : index
    %58 = vector.load %arg15[%c0_20, %c0_21] : memref<8x32xbf16, #tpu.memory_space<vmem>>, vector<8x8xbf16>
    tpu.vector_store %arg15[%c0_20, %c0_21], %57 {strides = array<i32>} : memref<8x32xbf16, #tpu.memory_space<vmem>>, vector<8x8xbf16>,
    %59 = vector.extract_strided_slice %31 {offsets = [0, 8], sizes = [8, 8], strides = [1, 1]} : vector<8x96xf32> to vector<8x8xf32>
    %60 = vector.extract_strided_slice %31 {offsets = [0, 40], sizes = [8, 8], strides = [1, 1]} : vector<8x96xf32> to vector<8x8xf32>
    %61 = vector.extract_strided_slice %31 {offsets = [0, 72], sizes = [8, 8], strides = [1, 1]} : vector<8x96xf32> to vector<8x8xf32>
    %62 = arith.truncf %59 : vector<8x8xf32> to vector<8x8xbf16>
    %63 = arith.truncf %60 : vector<8x8xf32> to vector<8x8xbf16>
    %64 = tpu.transpose %63, [1, 0] : vector<8x8xbf16> -> vector<8x8xbf16>
    %cst_22 = arith.constant dense<0.000000e+00> : vector<8x8xf32>
    %65 = tpu.matmul %62, %64, %cst_22 {dimension_numbers = #tpu.dot_dimension_numbers<[1], [0], [0], [1], [0, 0, 1, 1], [], []>} : vector<8x8xbf16>, vector<8x8xbf16>, vector<8x8xf32> -> vector<8x8xf32>
    %cst_23 = arith.constant -1.000000e+04 : f32
    %66 = vector.broadcast %cst_23 : f32 to vector<8x8xf32>
    %67 = arith.select %34, %65, %66 : vector<8x8xi1>, vector<8x8xf32>
    %cst_24 = arith.constant dense<0xFF800000> : vector<8xf32>
    %68 = vector.multi_reduction <maximumf>, %67, %cst_24 [1] : vector<8x8xf32> to vector<8xf32>
    %69 = vector.shape_cast %68 : vector<8xf32> to vector<8x1xf32>
    %70 = vector.broadcast %69 : vector<8x1xf32> to vector<8x8xf32>
    %71 = arith.subf %67, %70 : vector<8x8xf32>
    %72 = math.exp %71 : vector<8x8xf32>
    %cst_25 = arith.constant dense<0.000000e+00> : vector<8xf32>
    %73 = vector.multi_reduction <add>, %72, %cst_25 [1] : vector<8x8xf32> to vector<8xf32>
    %74 = vector.shape_cast %73 : vector<8xf32> to vector<8x1xf32>
    %75 = tpu.reciprocal %74 {approx = true} : vector<8x1xf32> -> vector<8x1xf32>
    %76 = vector.broadcast %75 : vector<8x1xf32> to vector<8x8xf32>
    %77 = arith.mulf %72, %76 : vector<8x8xf32>
    %78 = arith.truncf %77 : vector<8x8xf32> to vector<8x8xbf16>
    %79 = arith.truncf %61 : vector<8x8xf32> to vector<8x8xbf16>
    %cst_26 = arith.constant dense<0.000000e+00> : vector<8x8xf32>
    %80 = tpu.matmul %78, %79, %cst_26 {dimension_numbers = #tpu.dot_dimension_numbers<[1], [0], [0], [1], [0, 0, 1, 1], [], []>} : vector<8x8xbf16>, vector<8x8xbf16>, vector<8x8xf32> -> vector<8x8xf32>
    %81 = arith.truncf %80 : vector<8x8xf32> to vector<8x8xbf16>
    %c0_27 = arith.constant 0 : index
    %c8 = arith.constant 8 : index
    %82 = vector.load %arg15[%c0_27, %c8] : memref<8x32xbf16, #tpu.memory_space<vmem>>, vector<8x8xbf16>
    tpu.vector_store %arg15[%c0_27, %c8], %81 {strides = array<i32>} : memref<8x32xbf16, #tpu.memory_space<vmem>>, vector<8x8xbf16>,
    %83 = vector.extract_strided_slice %31 {offsets = [0, 16], sizes = [8, 8], strides = [1, 1]} : vector<8x96xf32> to vector<8x8xf32>
    %84 = vector.extract_strided_slice %31 {offsets = [0, 48], sizes = [8, 8], strides = [1, 1]} : vector<8x96xf32> to vector<8x8xf32>
    %85 = vector.extract_strided_slice %31 {offsets = [0, 80], sizes = [8, 8], strides = [1, 1]} : vector<8x96xf32> to vector<8x8xf32>
    %86 = arith.truncf %83 : vector<8x8xf32> to vector<8x8xbf16>
    %87 = arith.truncf %84 : vector<8x8xf32> to vector<8x8xbf16>
    %88 = tpu.transpose %87, [1, 0] : vector<8x8xbf16> -> vector<8x8xbf16>
    %cst_28 = arith.constant dense<0.000000e+00> : vector<8x8xf32>
    %89 = tpu.matmul %86, %88, %cst_28 {dimension_numbers = #tpu.dot_dimension_numbers<[1], [0], [0], [1], [0, 0, 1, 1], [], []>} : vector<8x8xbf16>, vector<8x8xbf16>, vector<8x8xf32> -> vector<8x8xf32>
    %cst_29 = arith.constant -1.000000e+04 : f32
    %90 = vector.broadcast %cst_29 : f32 to vector<8x8xf32>
    %91 = arith.select %34, %89, %90 : vector<8x8xi1>, vector<8x8xf32>
    %cst_30 = arith.constant dense<0xFF800000> : vector<8xf32>
    %92 = vector.multi_reduction <maximumf>, %91, %cst_30 [1] : vector<8x8xf32> to vector<8xf32>
    %93 = vector.shape_cast %92 : vector<8xf32> to vector<8x1xf32>
    %94 = vector.broadcast %93 : vector<8x1xf32> to vector<8x8xf32>
    %95 = arith.subf %91, %94 : vector<8x8xf32>
    %96 = math.exp %95 : vector<8x8xf32>
    %cst_31 = arith.constant dense<0.000000e+00> : vector<8xf32>
    %97 = vector.multi_reduction <add>, %96, %cst_31 [1] : vector<8x8xf32> to vector<8xf32>
    %98 = vector.shape_cast %97 : vector<8xf32> to vector<8x1xf32>
    %99 = tpu.reciprocal %98 {approx = true} : vector<8x1xf32> -> vector<8x1xf32>
    %100 = vector.broadcast %99 : vector<8x1xf32> to vector<8x8xf32>
    %101 = arith.mulf %96, %100 : vector<8x8xf32>
    %102 = arith.truncf %101 : vector<8x8xf32> to vector<8x8xbf16>
    %103 = arith.truncf %85 : vector<8x8xf32> to vector<8x8xbf16>
    %cst_32 = arith.constant dense<0.000000e+00> : vector<8x8xf32>
    %104 = tpu.matmul %102, %103, %cst_32 {dimension_numbers = #tpu.dot_dimension_numbers<[1], [0], [0], [1], [0, 0, 1, 1], [], []>} : vector<8x8xbf16>, vector<8x8xbf16>, vector<8x8xf32> -> vector<8x8xf32>
    %105 = arith.truncf %104 : vector<8x8xf32> to vector<8x8xbf16>
    %c0_33 = arith.constant 0 : index
    %c16 = arith.constant 16 : index
    %106 = vector.load %arg15[%c0_33, %c16] : memref<8x32xbf16, #tpu.memory_space<vmem>>, vector<8x8xbf16>
    tpu.vector_store %arg15[%c0_33, %c16], %105 {strides = array<i32>} : memref<8x32xbf16, #tpu.memory_space<vmem>>, vector<8x8xbf16>,
    %107 = vector.extract_strided_slice %31 {offsets = [0, 24], sizes = [8, 8], strides = [1, 1]} : vector<8x96xf32> to vector<8x8xf32>
    %108 = vector.extract_strided_slice %31 {offsets = [0, 56], sizes = [8, 8], strides = [1, 1]} : vector<8x96xf32> to vector<8x8xf32>
    %109 = vector.extract_strided_slice %31 {offsets = [0, 88], sizes = [8, 8], strides = [1, 1]} : vector<8x96xf32> to vector<8x8xf32>
    %110 = arith.truncf %107 : vector<8x8xf32> to vector<8x8xbf16>
    %111 = arith.truncf %108 : vector<8x8xf32> to vector<8x8xbf16>
    %112 = tpu.transpose %111, [1, 0] : vector<8x8xbf16> -> vector<8x8xbf16>
    %cst_34 = arith.constant dense<0.000000e+00> : vector<8x8xf32>
    %113 = tpu.matmul %110, %112, %cst_34 {dimension_numbers = #tpu.dot_dimension_numbers<[1], [0], [0], [1], [0, 0, 1, 1], [], []>} : vector<8x8xbf16>, vector<8x8xbf16>, vector<8x8xf32> -> vector<8x8xf32>
    %cst_35 = arith.constant -1.000000e+04 : f32
    %114 = vector.broadcast %cst_35 : f32 to vector<8x8xf32>
    %115 = arith.select %34, %113, %114 : vector<8x8xi1>, vector<8x8xf32>
    %cst_36 = arith.constant dense<0xFF800000> : vector<8xf32>
    %116 = vector.multi_reduction <maximumf>, %115, %cst_36 [1] : vector<8x8xf32> to vector<8xf32>
    %117 = vector.shape_cast %116 : vector<8xf32> to vector<8x1xf32>
    %118 = vector.broadcast %117 : vector<8x1xf32> to vector<8x8xf32>
    %119 = arith.subf %115, %118 : vector<8x8xf32>
    %120 = math.exp %119 : vector<8x8xf32>
    %cst_37 = arith.constant dense<0.000000e+00> : vector<8xf32>
    %121 = vector.multi_reduction <add>, %120, %cst_37 [1] : vector<8x8xf32> to vector<8xf32>
    %122 = vector.shape_cast %121 : vector<8xf32> to vector<8x1xf32>
    %123 = tpu.reciprocal %122 {approx = true} : vector<8x1xf32> -> vector<8x1xf32>
    %124 = vector.broadcast %123 : vector<8x1xf32> to vector<8x8xf32>
    %125 = arith.mulf %120, %124 : vector<8x8xf32>
    %126 = arith.truncf %125 : vector<8x8xf32> to vector<8x8xbf16>
    %127 = arith.truncf %109 : vector<8x8xf32> to vector<8x8xbf16>
    %cst_38 = arith.constant dense<0.000000e+00> : vector<8x8xf32>
    %128 = tpu.matmul %126, %127, %cst_38 {dimension_numbers = #tpu.dot_dimension_numbers<[1], [0], [0], [1], [0, 0, 1, 1], [], []>} : vector<8x8xbf16>, vector<8x8xbf16>, vector<8x8xf32> -> vector<8x8xf32>
    %129 = arith.truncf %128 : vector<8x8xf32> to vector<8x8xbf16>
    %c0_39 = arith.constant 0 : index
    %c24 = arith.constant 24 : index
    %130 = vector.load %arg15[%c0_39, %c24] : memref<8x32xbf16, #tpu.memory_space<vmem>>, vector<8x8xbf16>
    tpu.vector_store %arg15[%c0_39, %c24], %129 {strides = array<i32>} : memref<8x32xbf16, #tpu.memory_space<vmem>>, vector<8x8xbf16>,
    %c0_40 = arith.constant 0 : index
    %c0_41 = arith.constant 0 : index
    %131 = vector.load %arg15[%c0_40, %c0_41] : memref<8x32xbf16, #tpu.memory_space<vmem>>, vector<8x32xbf16>
    %c0_42 = arith.constant 0 : index
    %c0_43 = arith.constant 0 : index
    %132 = vector.load %arg6[%c0_42, %c0_43] : memref<32x32xbf16, #tpu.memory_space<vmem>>, vector<32x32xbf16>
    %cst_44 = arith.constant dense<0.000000e+00> : vector<8x32xf32>
    %133 = tpu.matmul %131, %132, %cst_44 {dimension_numbers = #tpu.dot_dimension_numbers<[1], [0], [0], [1], [0, 0, 1, 1], [], []>} : vector<8x32xbf16>, vector<32x32xbf16>, vector<8x32xf32> -> vector<8x32xf32>
    %c0_45 = arith.constant 0 : index
    %c0_46 = arith.constant 0 : index
    %134 = vector.load %arg7[%c0_45, %c0_46] : memref<1x32xf32, #tpu.memory_space<vmem>>, vector<1x32xf32>
    %135 = vector.broadcast %134 : vector<1x32xf32> to vector<8x32xf32>
    %136 = arith.addf %133, %135 : vector<8x32xf32>
    %137 = arith.addf %1, %136 : vector<8x32xf32>
    %c0_47 = arith.constant 0 : index
    %c0_48 = arith.constant 0 : index
    %138 = vector.load %arg8[%c0_47, %c0_48] : memref<1x32xf32, #tpu.memory_space<vmem>>, vector<1x32xf32>
    %c0_49 = arith.constant 0 : index
    %c0_50 = arith.constant 0 : index
    %139 = vector.load %arg9[%c0_49, %c0_50] : memref<1x32xf32, #tpu.memory_space<vmem>>, vector<1x32xf32>
    %cst_51 = arith.constant dense<0.000000e+00> : vector<8xf32>
    %140 = vector.multi_reduction <add>, %137, %cst_51 [1] : vector<8x32xf32> to vector<8xf32>
    %141 = vector.shape_cast %140 : vector<8xf32> to vector<8x1xf32>
    %cst_52 = arith.constant 3.200000e+01 : f32
    %142 = vector.broadcast %cst_52 : f32 to vector<8x1xf32>
    %143 = arith.divf %141, %142 : vector<8x1xf32>
    %144 = vector.broadcast %143 : vector<8x1xf32> to vector<8x32xf32>
    %145 = arith.subf %137, %144 : vector<8x32xf32>
    %146 = arith.mulf %145, %145 : vector<8x32xf32>
    %cst_53 = arith.constant dense<0.000000e+00> : vector<8xf32>
    %147 = vector.multi_reduction <add>, %146, %cst_53 [1] : vector<8x32xf32> to vector<8xf32>
    %148 = vector.shape_cast %147 : vector<8xf32> to vector<8x1xf32>
    %cst_54 = arith.constant 3.200000e+01 : f32
    %149 = vector.broadcast %cst_54 : f32 to vector<8x1xf32>
    %150 = arith.divf %148, %149 : vector<8x1xf32>
    %151 = vector.broadcast %143 : vector<8x1xf32> to vector<8x32xf32>
    %152 = arith.subf %137, %151 : vector<8x32xf32>
    %cst_55 = arith.constant 9.99999974E-6 : f32
    %153 = vector.broadcast %cst_55 : f32 to vector<8x1xf32>
    %154 = arith.addf %150, %153 : vector<8x1xf32>
    %155 = math.rsqrt %154 : vector<8x1xf32>
    %156 = vector.broadcast %155 : vector<8x1xf32> to vector<8x32xf32>
    %157 = arith.mulf %152, %156 : vector<8x32xf32>
    %158 = vector.broadcast %138 : vector<1x32xf32> to vector<8x32xf32>
    %159 = arith.mulf %157, %158 : vector<8x32xf32>
    %160 = vector.broadcast %139 : vector<1x32xf32> to vector<8x32xf32>
    %161 = arith.addf %159, %160 : vector<8x32xf32>
    %162 = arith.truncf %161 : vector<8x32xf32> to vector<8x32xbf16>
    %c0_56 = arith.constant 0 : index
    %c0_57 = arith.constant 0 : index
    %163 = vector.load %arg10[%c0_56, %c0_57] : memref<32x128xbf16, #tpu.memory_space<vmem>>, vector<32x128xbf16>
    %cst_58 = arith.constant dense<0.000000e+00> : vector<8x128xf32>
    %164 = tpu.matmul %162, %163, %cst_58 {dimension_numbers = #tpu.dot_dimension_numbers<[1], [0], [0], [1], [0, 0, 1, 1], [], []>} : vector<8x32xbf16>, vector<32x128xbf16>, vector<8x128xf32> -> vector<8x128xf32>
    %c0_59 = arith.constant 0 : index
    %c0_60 = arith.constant 0 : index
    %165 = vector.load %arg11[%c0_59, %c0_60] : memref<1x128xf32, #tpu.memory_space<vmem>>, vector<1x128xf32>
    %166 = vector.broadcast %165 : vector<1x128xf32> to vector<8x128xf32>
    %167 = arith.addf %164, %166 : vector<8x128xf32>
    %cst_61 = arith.constant 5.000000e-01 : f32
    %168 = vector.broadcast %cst_61 : f32 to vector<8x128xf32>
    %169 = arith.mulf %168, %167 : vector<8x128xf32>
    %cst_62 = arith.constant 4.471500e-02 : f32
    %170 = vector.broadcast %cst_62 : f32 to vector<8x128xf32>
    %171 = arith.mulf %170, %167 : vector<8x128xf32>
    %172 = arith.mulf %171, %167 : vector<8x128xf32>
    %173 = arith.mulf %172, %167 : vector<8x128xf32>
    %174 = arith.addf %167, %173 : vector<8x128xf32>
    %cst_63 = arith.constant 0.797884583 : f32
    %175 = vector.broadcast %cst_63 : f32 to vector<8x128xf32>
    %176 = arith.mulf %175, %174 : vector<8x128xf32>
    %177 = math.tanh %176 : vector<8x128xf32>
    %cst_64 = arith.constant 1.000000e+00 : f32
    %178 = vector.broadcast %cst_64 : f32 to vector<8x128xf32>
    %179 = arith.addf %178, %177 : vector<8x128xf32>
    %180 = arith.mulf %169, %179 : vector<8x128xf32>
    %181 = arith.truncf %180 : vector<8x128xf32> to vector<8x128xbf16>
    %c0_65 = arith.constant 0 : index
    %c0_66 = arith.constant 0 : index
    %182 = vector.load %arg12[%c0_65, %c0_66] : memref<128x32xbf16, #tpu.memory_space<vmem>>, vector<128x32xbf16>
    %cst_67 = arith.constant dense<0.000000e+00> : vector<8x32xf32>
    %183 = tpu.matmul %181, %182, %cst_67 {dimension_numbers = #tpu.dot_dimension_numbers<[1], [0], [0], [1], [0, 0, 1, 1], [], []>} : vector<8x128xbf16>, vector<128x32xbf16>, vector<8x32xf32> -> vector<8x32xf32>
    %c0_68 = arith.constant 0 : index
    %c0_69 = arith.constant 0 : index
    %184 = vector.load %arg13[%c0_68, %c0_69] : memref<1x32xf32, #tpu.memory_space<vmem>>, vector<1x32xf32>
    %185 = vector.broadcast %184 : vector<1x32xf32> to vector<8x32xf32>
    %186 = arith.addf %183, %185 : vector<8x32xf32>
    %187 = arith.addf %137, %186 : vector<8x32xf32>
    %c0_70 = arith.constant 0 : index
    %c0_71 = arith.constant 0 : index
    %c0_72 = arith.constant 0 : index
    %188 = vector.load %arg14[%c0_70, %c0_71, %c0_72] : memref<1x8x32xf32, #tpu.memory_space<vmem>>, vector<1x8x32xf32>
    %189 = vector.shape_cast %188 : vector<1x8x32xf32> to vector<8x32xf32>
    %190 = vector.shape_cast %187 : vector<8x32xf32> to vector<1x8x32xf32>
    tpu.vector_store %arg14[%c0_70, %c0_71, %c0_72], %190 {strides = array<i32>} : memref<1x8x32xf32, #tpu.memory_space<vmem>>, vector<1x8x32xf32>,
    return
  }
  func.func @transform_0(%arg0: i32) -> (i32, i32, i32) {
    %c0_i32 = arith.constant 0 : i32
    %c0_i32_0 = arith.constant 0 : i32
    %c0_i32_1 = arith.constant 0 : i32
    return %arg0, %c0_i32, %c0_i32_0 : i32, i32, i32
  }
  func.func @transform_1(%arg0: i32) -> (i32, i32) {
    %c0_i32 = arith.constant 0 : i32
    %c0_i32_0 = arith.constant 0 : i32
    %c0_i32_1 = arith.constant 0 : i32
    return %c0_i32, %c0_i32_0 : i32, i32
  }
  func.func @transform_2(%arg0: i32) -> (i32, i32) {
    %c0_i32 = arith.constant 0 : i32
    %c0_i32_0 = arith.constant 0 : i32
    %c0_i32_1 = arith.constant 0 : i32
    return %c0_i32, %c0_i32_0 : i32, i32
  }
  func.func @transform_3(%arg0: i32) -> (i32, i32) {
    %c0_i32 = arith.constant 0 : i32
    %c0_i32_0 = arith.constant 0 : i32
    %c0_i32_1 = arith.constant 0 : i32
    return %c0_i32, %c0_i32_0 : i32, i32
  }
  func.func @transform_4(%arg0: i32) -> (i32, i32) {
    %c0_i32 = arith.constant 0 : i32
    %c0_i32_0 = arith.constant 0 : i32
    %c0_i32_1 = arith.constant 0 : i32
    return %c0_i32, %c0_i32_0 : i32, i32
  }
  func.func @transform_5(%arg0: i32) -> (i32, i32) {
    %c0_i32 = arith.constant 0 : i32
    %c0_i32_0 = arith.constant 0 : i32
    %c0_i32_1 = arith.constant 0 : i32
    return %c0_i32, %c0_i32_0 : i32, i32
  }
  func.func @transform_6(%arg0: i32) -> (i32, i32) {
    %c0_i32 = arith.constant 0 : i32
    %c0_i32_0 = arith.constant 0 : i32
    %c0_i32_1 = arith.constant 0 : i32
    return %c0_i32, %c0_i32_0 : i32, i32
  }
  func.func @transform_7(%arg0: i32) -> (i32, i32) {
    %c0_i32 = arith.constant 0 : i32
    %c0_i32_0 = arith.constant 0 : i32
    %c0_i32_1 = arith.constant 0 : i32
    return %c0_i32, %c0_i32_0 : i32, i32
  }
  func.func @transform_8(%arg0: i32) -> (i32, i32) {
    %c0_i32 = arith.constant 0 : i32
    %c0_i32_0 = arith.constant 0 : i32
    %c0_i32_1 = arith.constant 0 : i32
    return %c0_i32, %c0_i32_0 : i32, i32
  }
  func.func @transform_9(%arg0: i32) -> (i32, i32) {
    %c0_i32 = arith.constant 0 : i32
    %c0_i32_0 = arith.constant 0 : i32
    %c0_i32_1 = arith.constant 0 : i32
    return %c0_i32, %c0_i32_0 : i32, i32
  }
  func.func @transform_10(%arg0: i32) -> (i32, i32) {
    %c0_i32 = arith.constant 0 : i32
    %c0_i32_0 = arith.constant 0 : i32
    %c0_i32_1 = arith.constant 0 : i32
    return %c0_i32, %c0_i32_0 : i32, i32
  }
  func.func @transform_11(%arg0: i32) -> (i32, i32) {
    %c0_i32 = arith.constant 0 : i32
    %c0_i32_0 = arith.constant 0 : i32
    %c0_i32_1 = arith.constant 0 : i32
    return %c0_i32, %c0_i32_0 : i32, i32
  }
  func.func @transform_12(%arg0: i32) -> (i32, i32) {
    %c0_i32 = arith.constant 0 : i32
    %c0_i32_0 = arith.constant 0 : i32
    %c0_i32_1 = arith.constant 0 : i32
    return %c0_i32, %c0_i32_0 : i32, i32
  }
  func.func @transform_13(%arg0: i32) -> (i32, i32, i32) {
    %c0_i32 = arith.constant 0 : i32
    %c0_i32_0 = arith.constant 0 : i32
    %c0_i32_1 = arith.constant 0 : i32
    return %arg0, %c0_i32, %c0_i32_0 : i32, i32, i32
  }
}

</mosaic_0001>

<llo_original>
// kernel: tpu_custom_call.1
$region0: #{tpu_custom_call.1}
  #allocation0 [shape = 'u32[]', space=smem, size = 0x4, offset = 0x4, fixed_abs, tag = 'smem constant byte address 0x4 - core index']
  #allocation1 [shape = 'u32[144,128]{1,0:T(1,128)}', space=vmem, size = 0x12000, scoped, tag = 'internal scratch']
  #allocation2 [shape = 'bf16[8,32]{1,0:T(8,128)(2,1)}', space=vmem, size = 0x800, scoped, tag = 'scratch operand']
  %s0 = inlined_call_operand.hbm [shape: f32[2,8,32], index: 0, kind: input, shape index: {}]
  %s1 = inlined_call_operand.hbm [shape: f32[1,32], index: 1, kind: input, shape index: {}]
  %s2 = inlined_call_operand.hbm [shape: f32[1,32], index: 2, kind: input, shape index: {}]
  %s3 = inlined_call_operand.hbm [shape: bf16[32,96], index: 3, kind: input, shape index: {}]
  %s4 = inlined_call_operand.hbm [shape: f32[1,96], index: 4, kind: input, shape index: {}]
  %s5 = inlined_call_operand.hbm [shape: bf16[32,32], index: 5, kind: input, shape index: {}]
  %s6 = inlined_call_operand.hbm [shape: f32[1,32], index: 6, kind: input, shape index: {}]
  %s7 = inlined_call_operand.hbm [shape: f32[1,32], index: 7, kind: input, shape index: {}]
  %s8 = inlined_call_operand.hbm [shape: f32[1,32], index: 8, kind: input, shape index: {}]
  %s9 = inlined_call_operand.hbm [shape: bf16[32,128], index: 9, kind: input, shape index: {}]
  %s10 = inlined_call_operand.hbm [shape: f32[1,128], index: 10, kind: input, shape index: {}]
  %s11 = inlined_call_operand.hbm [shape: bf16[128,32], index: 11, kind: input, shape index: {}]
  %s12 = inlined_call_operand.hbm [shape: f32[1,32], index: 12, kind: input, shape index: {}]
  %s13 = inlined_call_operand.hbm [shape: f32[2,8,32], index: 13, kind: output, shape index: {}]
  %s14 = sld [smem:[#allocation0]]
  $region137: #{tpu_custom_call.1} parent=0
    _
  %s16 = ssub.s32 1, %s14
  %s17 = scalar_select 0, %s16, %s14
  $region1: #{tpu_custom_call.1} parent=0
    #allocation3 [shape = 'u8[8192]{0}', space=vmem, size = 0x2000, scoped, tag = 'input window, operand 0']
    #allocation4 [shape = 's32[2]{0}', space=sflag, size = 0x8, scoped, tag = 'scoped memory for tpu_custom_call.1']
    #allocation5 [shape = 's32[2]{0}', space=sflag, size = 0x8, scoped, tag = 'scoped memory for tpu_custom_call.1']
    #allocation6 [shape = 'u8[512]{0}', space=vmem, size = 0x400, scoped, tag = 'input window, operand 1, single buffered']
    #allocation7 [shape = 's32[1]{0}', space=sflag, size = 0x4, scoped, tag = 'scoped memory for tpu_custom_call.1']
    #allocation8 [shape = 'u8[512]{0}', space=vmem, size = 0x400, scoped, tag = 'input window, operand 2, single buffered']
    #allocation9 [shape = 'u8[8192]{0}', space=vmem, size = 0x2000, scoped, tag = 'input window, operand 3, single buffered']
    #allocation10 [shape = 's32[1]{0}', space=sflag, size = 0x4, scoped, tag = 'scoped memory for tpu_custom_call.1']
    #allocation11 [shape = 'u8[512]{0}', space=vmem, size = 0x400, scoped, tag = 'input window, operand 4, single buffered']
    #allocation12 [shape = 'u8[8192]{0}', space=vmem, size = 0x2000, scoped, tag = 'input window, operand 5, single buffered']
    #allocation13 [shape = 's32[1]{0}', space=sflag, size = 0x4, scoped, tag = 'scoped memory for tpu_custom_call.1']
    #allocation14 [shape = 'u8[512]{0}', space=vmem, size = 0x400, scoped, tag = 'input window, operand 6, single buffered']
    #allocation15 [shape = 'u8[512]{0}', space=vmem, size = 0x400, scoped, tag = 'input window, operand 7, single buffered']
    #allocation16 [shape = 's32[1]{0}', space=sflag, size = 0x4, scoped, tag = 'scoped memory for tpu_custom_call.1']
    #allocation17 [shape = 'u8[512]{0}', space=vmem, size = 0x400, scoped, tag = 'input window, operand 8, single buffered']
    #allocation18 [shape = 'u8[8192]{0}', space=vmem, size = 0x2000, scoped, tag = 'input window, operand 9, single buffered']
    #allocation19 [shape = 's32[1]{0}', space=sflag, size = 0x4, scoped, tag = 'scoped memory for tpu_custom_call.1']
    #allocation20 [shape = 'u8[512]{0}', space=vmem, size = 0x400, scoped, tag = 'input window, operand 10, single buffered']
    #allocation21 [shape = 'u8[32768]{0}', space=vmem, size = 0x8000, scoped, tag = 'input window, operand 11, single buffered']
    #allocation22 [shape = 's32[1]{0}', space=sflag, size = 0x4, scoped, tag = 'scoped memory for tpu_custom_call.1']
    #allocation23 [shape = 'u8[512]{0}', space=vmem, size = 0x400, scoped, tag = 'input window, operand 12, single buffered']
    #allocation24 [shape = 'u8[8192]{0}', space=vmem, size = 0x2000, scoped, tag = 'output window, operand 0']
    %18 = vsyncpa [#allocation4], 0
    %s19 = scalar_lea.sflag [#allocation4], 1
    %20 = vsyncpa %s19, 0
    %21 = vsyncpa [#allocation7], 0
    %22 = vsyncpa [#allocation10], 0
    %23 = vsyncpa [#allocation13], 0
    %24 = vsyncpa [#allocation16], 0
    %25 = vsyncpa [#allocation19], 0
    %26 = vsyncpa [#allocation22], 0
    %27 = vsyncpa [#allocation5], 0
    %s28 = scalar_lea.sflag [#allocation5], 1
    %29 = vsyncpa %s28, 0
    loop: start=0, step=1, limit=4
    $region2: #{tpu_custom_call.1} parent=1 // loop_pre_header
      _
    $region3: #{tpu_custom_call.1} parent=1 // loop_header
      %s31 = sphi 0, %s35
      %p32 = scmp.ge.s32.totalorder %s31, 4
      %s41 = sphi 0, %s43
      %s44 = sphi 0, %s41
      %s45 = sphi 0, %s44
      %s61 = sphi 0, %s45
      %s65 = sphi 0, %s65
      %s67 = sphi 0, %s65
      %s68 = sphi 0, %s67
      %s82 = sphi 0, %s68
      %s86 = sphi 0, %s86
      %s88 = sphi 0, %s86
      %s89 = sphi 0, %s88
      %s103 = sphi 0, %s89
      %s107 = sphi 0, %s107
      %s109 = sphi 0, %s107
      %s110 = sphi 0, %s109
      %s124 = sphi 0, %s110
      %s128 = sphi 0, %s128
      %s130 = sphi 0, %s128
      %s131 = sphi 0, %s130
      %s145 = sphi 0, %s131
      %s149 = sphi 0, %s149
      %s151 = sphi 0, %s149
      %s152 = sphi 0, %s151
      %s166 = sphi 0, %s152
      %s170 = sphi 0, %s170
      %s172 = sphi 0, %s170
      %s173 = sphi 0, %s172
      %s187 = sphi 0, %s173
      %s191 = sphi 0, %s191
      %s193 = sphi 0, %s191
      %s194 = sphi 0, %s193
      %s208 = sphi 0, %s194
      %s212 = sphi 0, %s212
      %s214 = sphi 0, %s212
      %s215 = sphi 0, %s214
      %s229 = sphi 0, %s215
      %s233 = sphi 0, %s233
      %s235 = sphi 0, %s233
      %s236 = sphi 0, %s235
      %s250 = sphi 0, %s236
      %s254 = sphi 0, %s254
      %s256 = sphi 0, %s254
      %s257 = sphi 0, %s256
      %s271 = sphi 0, %s257
      %s275 = sphi 0, %s275
      %s277 = sphi 0, %s275
      %s278 = sphi 0, %s277
      %s292 = sphi 0, %s278
      %s296 = sphi 0, %s296
      %s298 = sphi 0, %s296
      %s299 = sphi 0, %s298
      %s313 = sphi 0, %s299
      %s319 = sphi 0, %s321
      %s322 = sphi 0, %s319
      %s323 = sphi 0, %s322
      %s339 = sphi 0, %s323
    $region4: #{tpu_custom_call.1} parent=1 // loop_header_branch
      %34 = sbr.rel (%p32) target = $region8
    $region5: #{tpu_custom_call.1} parent=1 // loop_body
      %s36 = ssub.s32 %s31, 1
      %s37 = ssub.s32 %s31, 2
      %s38 = sadd.s32 %s31, 1
      %s39 = ssub.s32 %s31, %s38
      %p40 = scmp.eq.s32.totalorder %s39, 0
      %s42 = sadd.s32 %s41, 1
      %s43 = scalar_select %p40, %s41, %s42
      %p46 = pneg %p40
      %p47 = scmp.eq.s32.totalorder %s31, 1
      %p48 = por %p46, %p47
      %p49 = scmp.ne.s32.totalorder %s41, %s44
      %p50 = scmp.eq.s32.totalorder %s31, 0
      %p51 = por %p49, %p50
      %p52 = scmp.ne.s32.totalorder %s41, %s44
      %p53 = scmp.eq.s32.totalorder %s36, 1
      %p54 = por %p52, %p53
      %p55 = scmp.ne.s32.totalorder %s44, %s45
      %p56 = scmp.eq.s32.totalorder %s36, 0
      %p57 = por %p55, %p56
      %p58 = scmp.ne.s32.totalorder %s44, %s45
      %p59 = scmp.eq.s32.totalorder %s37, 1
      %p60 = por %p58, %p59
      %p62 = scmp.ne.s32.totalorder %s45, %s61
      %p63 = scmp.eq.s32.totalorder %s37, 0
      %p64 = por %p62, %p63
      %s66 = sadd.s32 %s65, 1
      %p69 = scmp.eq.s32.totalorder %s31, 1
      %p70 = scmp.ne.s32.totalorder %s65, %s67
      %p71 = scmp.eq.s32.totalorder %s31, 0
      %p72 = por %p70, %p71
      %p73 = scmp.ne.s32.totalorder %s65, %s67
      %p74 = scmp.eq.s32.totalorder %s36, 1
      %p75 = por %p73, %p74
      %p76 = scmp.ne.s32.totalorder %s67, %s68
      %p77 = scmp.eq.s32.totalorder %s36, 0
      %p78 = por %p76, %p77
      %p79 = scmp.ne.s32.totalorder %s67, %s68
      %p80 = scmp.eq.s32.totalorder %s37, 1
      %p81 = por %p79, %p80
      %p83 = scmp.ne.s32.totalorder %s68, %s82
      %p84 = scmp.eq.s32.totalorder %s37, 0
      %p85 = por %p83, %p84
      %s87 = sadd.s32 %s86, 1
      %p90 = scmp.eq.s32.totalorder %s31, 1
      %p91 = scmp.ne.s32.totalorder %s86, %s88
      %p92 = scmp.eq.s32.totalorder %s31, 0
      %p93 = por %p91, %p92
      %p94 = scmp.ne.s32.totalorder %s86, %s88
      %p95 = scmp.eq.s32.totalorder %s36, 1
      %p96 = por %p94, %p95
      %p97 = scmp.ne.s32.totalorder %s88, %s89
      %p98 = scmp.eq.s32.totalorder %s36, 0
      %p99 = por %p97, %p98
      %p100 = scmp.ne.s32.totalorder %s88, %s89
      %p101 = scmp.eq.s32.totalorder %s37, 1
      %p102 = por %p100, %p101
      %p104 = scmp.ne.s32.totalorder %s89, %s103
      %p105 = scmp.eq.s32.totalorder %s37, 0
      %p106 = por %p104, %p105
      %s108 = sadd.s32 %s107, 1
      %p111 = scmp.eq.s32.totalorder %s31, 1
      %p112 = scmp.ne.s32.totalorder %s107, %s109
      %p113 = scmp.eq.s32.totalorder %s31, 0
      %p114 = por %p112, %p113
      %p115 = scmp.ne.s32.totalorder %s107, %s109
      %p116 = scmp.eq.s32.totalorder %s36, 1
      %p117 = por %p115, %p116
      %p118 = scmp.ne.s32.totalorder %s109, %s110
      %p119 = scmp.eq.s32.totalorder %s36, 0
      %p120 = por %p118, %p119
      %p121 = scmp.ne.s32.totalorder %s109, %s110
      %p122 = scmp.eq.s32.totalorder %s37, 1
      %p123 = por %p121, %p122
      %p125 = scmp.ne.s32.totalorder %s110, %s124
      %p126 = scmp.eq.s32.totalorder %s37, 0
      %p127 = por %p125, %p126
      %s129 = sadd.s32 %s128, 1
      %p132 = scmp.eq.s32.totalorder %s31, 1
      %p133 = scmp.ne.s32.totalorder %s128, %s130
      %p134 = scmp.eq.s32.totalorder %s31, 0
      %p135 = por %p133, %p134
      %p136 = scmp.ne.s32.totalorder %s128, %s130
      %p137 = scmp.eq.s32.totalorder %s36, 1
      %p138 = por %p136, %p137
      %p139 = scmp.ne.s32.totalorder %s130, %s131
      %p140 = scmp.eq.s32.totalorder %s36, 0
      %p141 = por %p139, %p140
      %p142 = scmp.ne.s32.totalorder %s130, %s131
      %p143 = scmp.eq.s32.totalorder %s37, 1
      %p144 = por %p142, %p143
      %p146 = scmp.ne.s32.totalorder %s131, %s145
      %p147 = scmp.eq.s32.totalorder %s37, 0
      %p148 = por %p146, %p147
      %s150 = sadd.s32 %s149, 1
      %p153 = scmp.eq.s32.totalorder %s31, 1
      %p154 = scmp.ne.s32.totalorder %s149, %s151
      %p155 = scmp.eq.s32.totalorder %s31, 0
      %p156 = por %p154, %p155
      %p157 = scmp.ne.s32.totalorder %s149, %s151
      %p158 = scmp.eq.s32.totalorder %s36, 1
      %p159 = por %p157, %p158
      %p160 = scmp.ne.s32.totalorder %s151, %s152
      %p161 = scmp.eq.s32.totalorder %s36, 0
      %p162 = por %p160, %p161
      %p163 = scmp.ne.s32.totalorder %s151, %s152
      %p164 = scmp.eq.s32.totalorder %s37, 1
      %p165 = por %p163, %p164
      %p167 = scmp.ne.s32.totalorder %s152, %s166
      %p168 = scmp.eq.s32.totalorder %s37, 0
      %p169 = por %p167, %p168
      %s171 = sadd.s32 %s170, 1
      %p174 = scmp.eq.s32.totalorder %s31, 1
      %p175 = scmp.ne.s32.totalorder %s170, %s172
      %p176 = scmp.eq.s32.totalorder %s31, 0
      %p177 = por %p175, %p176
      %p178 = scmp.ne.s32.totalorder %s170, %s172
      %p179 = scmp.eq.s32.totalorder %s36, 1
      %p180 = por %p178, %p179
      %p181 = scmp.ne.s32.totalorder %s172, %s173
      %p182 = scmp.eq.s32.totalorder %s36, 0
      %p183 = por %p181, %p182
      %p184 = scmp.ne.s32.totalorder %s172, %s173
      %p185 = scmp.eq.s32.totalorder %s37, 1
      %p186 = por %p184, %p185
      %p188 = scmp.ne.s32.totalorder %s173, %s187
      %p189 = scmp.eq.s32.totalorder %s37, 0
      %p190 = por %p188, %p189
      %s192 = sadd.s32 %s191, 1
      %p195 = scmp.eq.s32.totalorder %s31, 1
      %p196 = scmp.ne.s32.totalorder %s191, %s193
      %p197 = scmp.eq.s32.totalorder %s31, 0
      %p198 = por %p196, %p197
      %p199 = scmp.ne.s32.totalorder %s191, %s193
      %p200 = scmp.eq.s32.totalorder %s36, 1
      %p201 = por %p199, %p200
      %p202 = scmp.ne.s32.totalorder %s193, %s194
      %p203 = scmp.eq.s32.totalorder %s36, 0
      %p204 = por %p202, %p203
      %p205 = scmp.ne.s32.totalorder %s193, %s194
      %p206 = scmp.eq.s32.totalorder %s37, 1
      %p207 = por %p205, %p206
      %p209 = scmp.ne.s32.totalorder %s194, %s208
      %p210 = scmp.eq.s32.totalorder %s37, 0
      %p211 = por %p209, %p210
      %s213 = sadd.s32 %s212, 1
      %p216 = scmp.eq.s32.totalorder %s31, 1
      %p217 = scmp.ne.s32.totalorder %s212, %s214
      %p218 = scmp.eq.s32.totalorder %s31, 0
      %p219 = por %p217, %p218
      %p220 = scmp.ne.s32.totalorder %s212, %s214
      %p221 = scmp.eq.s32.totalorder %s36, 1
      %p222 = por %p220, %p221
      %p223 = scmp.ne.s32.totalorder %s214, %s215
      %p224 = scmp.eq.s32.totalorder %s36, 0
      %p225 = por %p223, %p224
      %p226 = scmp.ne.s32.totalorder %s214, %s215
      %p227 = scmp.eq.s32.totalorder %s37, 1
      %p228 = por %p226, %p227
      %p230 = scmp.ne.s32.totalorder %s215, %s229
      %p231 = scmp.eq.s32.totalorder %s37, 0
      %p232 = por %p230, %p231
      %s234 = sadd.s32 %s233, 1
      %p237 = scmp.eq.s32.totalorder %s31, 1
      %p238 = scmp.ne.s32.totalorder %s233, %s235
      %p239 = scmp.eq.s32.totalorder %s31, 0
      %p240 = por %p238, %p239
      %p241 = scmp.ne.s32.totalorder %s233, %s235
      %p242 = scmp.eq.s32.totalorder %s36, 1
      %p243 = por %p241, %p242
      %p244 = scmp.ne.s32.totalorder %s235, %s236
      %p245 = scmp.eq.s32.totalorder %s36, 0
      %p246 = por %p244, %p245
      %p247 = scmp.ne.s32.totalorder %s235, %s236
      %p248 = scmp.eq.s32.totalorder %s37, 1
      %p249 = por %p247, %p248
      %p251 = scmp.ne.s32.totalorder %s236, %s250
      %p252 = scmp.eq.s32.totalorder %s37, 0
      %p253 = por %p251, %p252
      %s255 = sadd.s32 %s254, 1
      %p258 = scmp.eq.s32.totalorder %s31, 1
      %p259 = scmp.ne.s32.totalorder %s254, %s256
      %p260 = scmp.eq.s32.totalorder %s31, 0
      %p261 = por %p259, %p260
      %p262 = scmp.ne.s32.totalorder %s254, %s256
      %p263 = scmp.eq.s32.totalorder %s36, 1
      %p264 = por %p262, %p263
      %p265 = scmp.ne.s32.totalorder %s256, %s257
      %p266 = scmp.eq.s32.totalorder %s36, 0
      %p267 = por %p265, %p266
      %p268 = scmp.ne.s32.totalorder %s256, %s257
      %p269 = scmp.eq.s32.totalorder %s37, 1
      %p270 = por %p268, %p269
      %p272 = scmp.ne.s32.totalorder %s257, %s271
      %p273 = scmp.eq.s32.totalorder %s37, 0
      %p274 = por %p272, %p273
      %s276 = sadd.s32 %s275, 1
      %p279 = scmp.eq.s32.totalorder %s31, 1
      %p280 = scmp.ne.s32.totalorder %s275, %s277
      %p281 = scmp.eq.s32.totalorder %s31, 0
      %p282 = por %p280, %p281
      %p283 = scmp.ne.s32.totalorder %s275, %s277
      %p284 = scmp.eq.s32.totalorder %s36, 1
      %p285 = por %p283, %p284
      %p286 = scmp.ne.s32.totalorder %s277, %s278
      %p287 = scmp.eq.s32.totalorder %s36, 0
      %p288 = por %p286, %p287
      %p289 = scmp.ne.s32.totalorder %s277, %s278
      %p290 = scmp.eq.s32.totalorder %s37, 1
      %p291 = por %p289, %p290
      %p293 = scmp.ne.s32.totalorder %s278, %s292
      %p294 = scmp.eq.s32.totalorder %s37, 0
      %p295 = por %p293, %p294
      %s297 = sadd.s32 %s296, 1
      %p300 = scmp.eq.s32.totalorder %s31, 1
      %p301 = scmp.ne.s32.totalorder %s296, %s298
      %p302 = scmp.eq.s32.totalorder %s31, 0
      %p303 = por %p301, %p302
      %p304 = scmp.ne.s32.totalorder %s296, %s298
      %p305 = scmp.eq.s32.totalorder %s36, 1
      %p306 = por %p304, %p305
      %p307 = scmp.ne.s32.totalorder %s298, %s299
      %p308 = scmp.eq.s32.totalorder %s36, 0
      %p309 = por %p307, %p308
      %p310 = scmp.ne.s32.totalorder %s298, %s299
      %p311 = scmp.eq.s32.totalorder %s37, 1
      %p312 = por %p310, %p311
      %p314 = scmp.ne.s32.totalorder %s299, %s313
      %p315 = scmp.eq.s32.totalorder %s37, 0
      %p316 = por %p314, %p315
      %s317 = ssub.s32 %s31, %s38
      %p318 = scmp.eq.s32.totalorder %s317, 0
      %s320 = sadd.s32 %s319, 1
      %s321 = scalar_select %p318, %s319, %s320
      %p324 = pneg %p318
      %p325 = scmp.eq.s32.totalorder %s31, 1
      %p326 = por %p324, %p325
      %p327 = scmp.ne.s32.totalorder %s319, %s322
      %p328 = scmp.eq.s32.totalorder %s31, 0
      %p329 = por %p327, %p328
      %p330 = scmp.ne.s32.totalorder %s319, %s322
      %p331 = scmp.eq.s32.totalorder %s36, 1
      %p332 = por %p330, %p331
      %p333 = scmp.ne.s32.totalorder %s322, %s323
      %p334 = scmp.eq.s32.totalorder %s36, 0
      %p335 = por %p333, %p334
      %p336 = scmp.ne.s32.totalorder %s322, %s323
      %p337 = scmp.eq.s32.totalorder %s37, 1
      %p338 = por %p336, %p337
      %p340 = scmp.ne.s32.totalorder %s323, %s339
      %p341 = scmp.eq.s32.totalorder %s37, 0
      %p342 = por %p340, %p341
      %p343 = scmp.le.s32.totalorder 1, %s31
      %p344 = scmp.lt.s32.totalorder %s31, 3
      %p345 = pnand %p343, %p344
      %p346 = pneg %p345
      // Predicated region
      $region9: #{tpu_custom_call.1} parent=5 // pred_check
        _
      $region10: #{tpu_custom_call.1} parent=5 // pred_check_branch
        %348 = sbr.rel (%p345) target = $region12
      $region11: #{tpu_custom_call.1} parent=5 // pred_region
        %s349 = ssub.s32 %s31, 1
        // Predicated region
        $region13: #{tpu_custom_call.1} parent=11 // pred_check
          %p350 = pneg %p78
        $region14: #{tpu_custom_call.1} parent=11 // pred_check_branch
          %352 = sbr.rel (%p350) target = $region16
        $region15: #{tpu_custom_call.1} parent=11 // pred_region
          %s354 = ssub.s32 16, 16
          %355 = vsyncadd [#allocation7], %s354
          %s357 = sshll.u32 [#allocation6], 4
          %s358 = int_to_ptr.vmem [resolvable:$true] %s357
          %360 = dma.hbm_to_vmem [thread:$0]  %s1, 16, %s358, [#allocation7]
        $region16: #{tpu_custom_call.1} parent=11 // pred_fallthru
          _
        // Predicated region
        $region17: #{tpu_custom_call.1} parent=11 // pred_check
          %p361 = pneg %p99
        $region18: #{tpu_custom_call.1} parent=11 // pred_check_branch
          %363 = sbr.rel (%p361) target = $region20
        $region19: #{tpu_custom_call.1} parent=11 // pred_region
          %s365 = ssub.s32 16, 16
          %366 = vsyncadd [#allocation7], %s365
          %s368 = sshll.u32 [#allocation8], 4
          %s369 = int_to_ptr.vmem [resolvable:$true] %s368
          %371 = dma.hbm_to_vmem [thread:$0]  %s2, 16, %s369, [#allocation7]
        $region20: #{tpu_custom_call.1} parent=11 // pred_fallthru
          _
        // Predicated region
        $region21: #{tpu_custom_call.1} parent=11 // pred_check
          %p372 = pneg %p120
        $region22: #{tpu_custom_call.1} parent=11 // pred_check_branch
          %374 = sbr.rel (%p372) target = $region24
        $region23: #{tpu_custom_call.1} parent=11 // pred_region
          %s376 = ssub.s32 256, 256
          %377 = vsyncadd [#allocation10], %s376
          %s378 = sshll.u32 [#allocation9], 4
          %s379 = int_to_ptr.vmem [resolvable:$true] %s378
          %384 = dma.hbm_to_vmem [thread:$0]  %s3, 256, %s379, [#allocation10], 64, 64, 4
        $region24: #{tpu_custom_call.1} parent=11 // pred_fallthru
          _
        // Predicated region
        $region25: #{tpu_custom_call.1} parent=11 // pred_check
          %p385 = pneg %p141
        $region26: #{tpu_custom_call.1} parent=11 // pred_check_branch
          %387 = sbr.rel (%p385) target = $region28
        $region27: #{tpu_custom_call.1} parent=11 // pred_region
          %s389 = ssub.s32 16, 16
          %390 = vsyncadd [#allocation10], %s389
          %s392 = sshll.u32 [#allocation11], 4
          %s393 = int_to_ptr.vmem [resolvable:$true] %s392
          %395 = dma.hbm_to_vmem [thread:$0]  %s4, 16, %s393, [#allocation10]
        $region28: #{tpu_custom_call.1} parent=11 // pred_fallthru
          _
        // Predicated region
        $region29: #{tpu_custom_call.1} parent=11 // pred_check
          %p396 = pneg %p162
        $region30: #{tpu_custom_call.1} parent=11 // pred_check_branch
          %398 = sbr.rel (%p396) target = $region32
        $region31: #{tpu_custom_call.1} parent=11 // pred_region
          %s400 = ssub.s32 256, 256
          %401 = vsyncadd [#allocation13], %s400
          %s402 = sshll.u32 [#allocation12], 4
          %s403 = int_to_ptr.vmem [resolvable:$true] %s402
          %408 = dma.hbm_to_vmem [thread:$0]  %s5, 256, %s403, [#allocation13], 64, 64, 4
        $region32: #{tpu_custom_call.1} parent=11 // pred_fallthru
          _
        // Predicated region
        $region33: #{tpu_custom_call.1} parent=11 // pred_check
          %p409 = pneg %p183
        $region34: #{tpu_custom_call.1} parent=11 // pred_check_branch
          %411 = sbr.rel (%p409) target = $region36
        $region35: #{tpu_custom_call.1} parent=11 // pred_region
          %s413 = ssub.s32 16, 16
          %414 = vsyncadd [#allocation13], %s413
          %s416 = sshll.u32 [#allocation14], 4
          %s417 = int_to_ptr.vmem [resolvable:$true] %s416
          %419 = dma.hbm_to_vmem [thread:$0]  %s6, 16, %s417, [#allocation13]
        $region36: #{tpu_custom_call.1} parent=11 // pred_fallthru
          _
        // Predicated region
        $region37: #{tpu_custom_call.1} parent=11 // pred_check
          %p420 = pneg %p204
        $region38: #{tpu_custom_call.1} parent=11 // pred_check_branch
          %422 = sbr.rel (%p420) target = $region40
        $region39: #{tpu_custom_call.1} parent=11 // pred_region
          %s424 = ssub.s32 16, 16
          %425 = vsyncadd [#allocation16], %s424
          %s427 = sshll.u32 [#allocation15], 4
          %s428 = int_to_ptr.vmem [resolvable:$true] %s427
          %430 = dma.hbm_to_vmem [thread:$0]  %s7, 16, %s428, [#allocation16]
        $region40: #{tpu_custom_call.1} parent=11 // pred_fallthru
          _
        // Predicated region
        $region41: #{tpu_custom_call.1} parent=11 // pred_check
          %p431 = pneg %p225
        $region42: #{tpu_custom_call.1} parent=11 // pred_check_branch
          %433 = sbr.rel (%p431) target = $region44
        $region43: #{tpu_custom_call.1} parent=11 // pred_region
          %s435 = ssub.s32 16, 16
          %436 = vsyncadd [#allocation16], %s435
          %s438 = sshll.u32 [#allocation17], 4
          %s439 = int_to_ptr.vmem [resolvable:$true] %s438
          %441 = dma.hbm_to_vmem [thread:$0]  %s8, 16, %s439, [#allocation16]
        $region44: #{tpu_custom_call.1} parent=11 // pred_fallthru
          _
        // Predicated region
        $region45: #{tpu_custom_call.1} parent=11 // pred_check
          %p442 = pneg %p246
        $region46: #{tpu_custom_call.1} parent=11 // pred_check_branch
          %444 = sbr.rel (%p442) target = $region48
        $region47: #{tpu_custom_call.1} parent=11 // pred_region
          %s446 = ssub.s32 256, 256
          %447 = vsyncadd [#allocation19], %s446
          %s448 = sshll.u32 [#allocation18], 4
          %s449 = int_to_ptr.vmem [resolvable:$true] %s448
          %454 = dma.hbm_to_vmem [thread:$0]  %s9, 256, %s449, [#allocation19], 64, 64, 4
        $region48: #{tpu_custom_call.1} parent=11 // pred_fallthru
          _
        // Predicated region
        $region49: #{tpu_custom_call.1} parent=11 // pred_check
          %p455 = pneg %p267
        $region50: #{tpu_custom_call.1} parent=11 // pred_check_branch
          %457 = sbr.rel (%p455) target = $region52
        $region51: #{tpu_custom_call.1} parent=11 // pred_region
          %s459 = ssub.s32 16, 16
          %460 = vsyncadd [#allocation19], %s459
          %s462 = sshll.u32 [#allocation20], 4
          %s463 = int_to_ptr.vmem [resolvable:$true] %s462
          %465 = dma.hbm_to_vmem [thread:$0]  %s10, 16, %s463, [#allocation19]
        $region52: #{tpu_custom_call.1} parent=11 // pred_fallthru
          _
        // Predicated region
        $region53: #{tpu_custom_call.1} parent=11 // pred_check
          %p466 = pneg %p288
        $region54: #{tpu_custom_call.1} parent=11 // pred_check_branch
          %468 = sbr.rel (%p466) target = $region56
        $region55: #{tpu_custom_call.1} parent=11 // pred_region
          %s470 = ssub.s32 1024, 1024
          %471 = vsyncadd [#allocation22], %s470
          %s472 = sshll.u32 [#allocation21], 4
          %s473 = int_to_ptr.vmem [resolvable:$true] %s472
          %478 = dma.hbm_to_vmem [thread:$0]  %s11, 1024, %s473, [#allocation22], 64, 64, 4
        $region56: #{tpu_custom_call.1} parent=11 // pred_fallthru
          _
        // Predicated region
        $region57: #{tpu_custom_call.1} parent=11 // pred_check
          %p479 = pneg %p309
        $region58: #{tpu_custom_call.1} parent=11 // pred_check_branch
          %481 = sbr.rel (%p479) target = $region60
        $region59: #{tpu_custom_call.1} parent=11 // pred_region
          %s483 = ssub.s32 16, 16
          %484 = vsyncadd [#allocation22], %s483
          %s486 = sshll.u32 [#allocation23], 4
          %s487 = int_to_ptr.vmem [resolvable:$true] %s486
          %489 = dma.hbm_to_vmem [thread:$0]  %s12, 16, %s487, [#allocation22]
        $region60: #{tpu_custom_call.1} parent=11 // pred_fallthru
          _
      $region12: #{tpu_custom_call.1} parent=5 // pred_fallthru
        _
      %p490 = scmp.lt.s32.totalorder %s31, 2
      // Predicated region
      $region61: #{tpu_custom_call.1} parent=5 // pred_check
        %p491 = pneg %p490
      $region62: #{tpu_custom_call.1} parent=5 // pred_check_branch
        %493 = sbr.rel (%p491) target = $region64
      $region63: #{tpu_custom_call.1} parent=5 // pred_region
        // Predicated region
        $region65: #{tpu_custom_call.1} parent=63 // pred_check
          %p494 = pneg %p51
        $region66: #{tpu_custom_call.1} parent=63 // pred_check_branch
          %496 = sbr.rel (%p494) target = $region68
        $region67: #{tpu_custom_call.1} parent=63 // pred_region
          %s497 = sand.u32 %s41, 1
          %s498 = scalar_lea.sflag [#allocation4], %s497
          %s499 = sand.u32 %s41, 1
          %s500 = smul.addr %s499, 8
          %s501 = scalar_lea.vmem [#allocation3], %s500
          %s503 = ssub.s32 128, 128
          %504 = vsyncadd %s498, %s503
          %s505 = smul.addr %s31, 128
          %s506 = scalar_lea.hbm %s0, %s505
          %s508 = sshll.u32 %s501, 4
          %s509 = int_to_ptr.vmem [resolvable:$true] %s508
          %511 = dma.hbm_to_vmem [thread:$0]  %s506, 128, %s509, %s498
        $region68: #{tpu_custom_call.1} parent=63 // pred_fallthru
          _
      $region64: #{tpu_custom_call.1} parent=5 // pred_fallthru
        _
      %p512 = scmp.le.s32.totalorder 1, %s31
      %p513 = scmp.lt.s32.totalorder %s31, 3
      %p514 = pnand %p512, %p513
      %p515 = pneg %p514
      // Predicated region
      $region69: #{tpu_custom_call.1} parent=5 // pred_check
        _
      $region70: #{tpu_custom_call.1} parent=5 // pred_check_branch
        %517 = sbr.rel (%p514) target = $region72
      $region71: #{tpu_custom_call.1} parent=5 // pred_region
        %s518 = ssub.s32 %s31, 1
        %s519 = sand.u32 %s44, 1
        %s520 = scalar_lea.sflag [#allocation4], %s519
        %s521 = sand.u32 %s44, 1
        %s522 = smul.addr %s521, 8
        %s523 = scalar_lea.vmem [#allocation3], %s522
        // Predicated region
        $region73: #{tpu_custom_call.1} parent=71 // pred_check
          %p524 = pneg %p57
        $region74: #{tpu_custom_call.1} parent=71 // pred_check_branch
          %526 = sbr.rel (%p524) target = $region76
        $region75: #{tpu_custom_call.1} parent=71 // pred_region
          %527 = dma.done %s520, 128
        $region76: #{tpu_custom_call.1} parent=71 // pred_fallthru
          _
        // Predicated region
        $region77: #{tpu_custom_call.1} parent=71 // pred_check
          %p528 = pneg %p78
        $region78: #{tpu_custom_call.1} parent=71 // pred_check_branch
          %530 = sbr.rel (%p528) target = $region80
        $region79: #{tpu_custom_call.1} parent=71 // pred_region
          %531 = dma.done [#allocation7], 16
        $region80: #{tpu_custom_call.1} parent=71 // pred_fallthru
          _
        // Predicated region
        $region81: #{tpu_custom_call.1} parent=71 // pred_check
          %p532 = pneg %p99
        $region82: #{tpu_custom_call.1} parent=71 // pred_check_branch
          %534 = sbr.rel (%p532) target = $region84
        $region83: #{tpu_custom_call.1} parent=71 // pred_region
          %535 = dma.done [#allocation7], 16
        $region84: #{tpu_custom_call.1} parent=71 // pred_fallthru
          _
        // Predicated region
        $region85: #{tpu_custom_call.1} parent=71 // pred_check
          %p536 = pneg %p120
        $region86: #{tpu_custom_call.1} parent=71 // pred_check_branch
          %538 = sbr.rel (%p536) target = $region88
        $region87: #{tpu_custom_call.1} parent=71 // pred_region
          %539 = dma.done [#allocation10], 256
        $region88: #{tpu_custom_call.1} parent=71 // pred_fallthru
          _
        // Predicated region
        $region89: #{tpu_custom_call.1} parent=71 // pred_check
          %p540 = pneg %p141
        $region90: #{tpu_custom_call.1} parent=71 // pred_check_branch
          %542 = sbr.rel (%p540) target = $region92
        $region91: #{tpu_custom_call.1} parent=71 // pred_region
          %543 = dma.done [#allocation10], 16
        $region92: #{tpu_custom_call.1} parent=71 // pred_fallthru
          _
        // Predicated region
        $region93: #{tpu_custom_call.1} parent=71 // pred_check
          %p544 = pneg %p162
        $region94: #{tpu_custom_call.1} parent=71 // pred_check_branch
          %546 = sbr.rel (%p544) target = $region96
        $region95: #{tpu_custom_call.1} parent=71 // pred_region
          %547 = dma.done [#allocation13], 256
        $region96: #{tpu_custom_call.1} parent=71 // pred_fallthru
          _
        // Predicated region
        $region97: #{tpu_custom_call.1} parent=71 // pred_check
          %p548 = pneg %p183
        $region98: #{tpu_custom_call.1} parent=71 // pred_check_branch
          %550 = sbr.rel (%p548) target = $region100
        $region99: #{tpu_custom_call.1} parent=71 // pred_region
          %551 = dma.done [#allocation13], 16
        $region100: #{tpu_custom_call.1} parent=71 // pred_fallthru
          _
        // Predicated region
        $region101: #{tpu_custom_call.1} parent=71 // pred_check
          %p552 = pneg %p204
        $region102: #{tpu_custom_call.1} parent=71 // pred_check_branch
          %554 = sbr.rel (%p552) target = $region104
        $region103: #{tpu_custom_call.1} parent=71 // pred_region
          %555 = dma.done [#allocation16], 16
        $region104: #{tpu_custom_call.1} parent=71 // pred_fallthru
          _
        // Predicated region
        $region105: #{tpu_custom_call.1} parent=71 // pred_check
          %p556 = pneg %p225
        $region106: #{tpu_custom_call.1} parent=71 // pred_check_branch
          %558 = sbr.rel (%p556) target = $region108
        $region107: #{tpu_custom_call.1} parent=71 // pred_region
          %559 = dma.done [#allocation16], 16
        $region108: #{tpu_custom_call.1} parent=71 // pred_fallthru
          _
        // Predicated region
        $region109: #{tpu_custom_call.1} parent=71 // pred_check
          %p560 = pneg %p246
        $region110: #{tpu_custom_call.1} parent=71 // pred_check_branch
          %562 = sbr.rel (%p560) target = $region112
        $region111: #{tpu_custom_call.1} parent=71 // pred_region
          %563 = dma.done [#allocation19], 256
        $region112: #{tpu_custom_call.1} parent=71 // pred_fallthru
          _
        // Predicated region
        $region113: #{tpu_custom_call.1} parent=71 // pred_check
          %p564 = pneg %p267
        $region114: #{tpu_custom_call.1} parent=71 // pred_check_branch
          %566 = sbr.rel (%p564) target = $region116
        $region115: #{tpu_custom_call.1} parent=71 // pred_region
          %567 = dma.done [#allocation19], 16
        $region116: #{tpu_custom_call.1} parent=71 // pred_fallthru
          _
        // Predicated region
        $region117: #{tpu_custom_call.1} parent=71 // pred_check
          %p568 = pneg %p288
        $region118: #{tpu_custom_call.1} parent=71 // pred_check_branch
          %570 = sbr.rel (%p568) target = $region120
        $region119: #{tpu_custom_call.1} parent=71 // pred_region
          %571 = dma.done [#allocation22], 1024
        $region120: #{tpu_custom_call.1} parent=71 // pred_fallthru
          _
        // Predicated region
        $region121: #{tpu_custom_call.1} parent=71 // pred_check
          %p572 = pneg %p309
        $region122: #{tpu_custom_call.1} parent=71 // pred_check_branch
          %574 = sbr.rel (%p572) target = $region124
        $region123: #{tpu_custom_call.1} parent=71 // pred_region
          %575 = dma.done [#allocation22], 16
        $region124: #{tpu_custom_call.1} parent=71 // pred_fallthru
          _
        %s576 = sand.u32 %s44, 1
        %s577 = scalar_lea.sflag [#allocation4], %s576
        %s578 = sand.u32 %s44, 1
        %s579 = smul.addr %s578, 8
        %s580 = scalar_lea.vmem [#allocation3], %s579
        %p581 = pneg %p57
        %p582 = pneg %p54
        %p583 = pneg %p78
        %p584 = pneg %p75
        %p585 = pneg %p99
        %p586 = pneg %p96
        %p587 = pneg %p120
        %p588 = pneg %p117
        %p589 = pneg %p141
        %p590 = pneg %p138
        %p591 = pneg %p162
        %p592 = pneg %p159
        %p593 = pneg %p183
        %p594 = pneg %p180
        %p595 = pneg %p204
        %p596 = pneg %p201
        %p597 = pneg %p225
        %p598 = pneg %p222
        %p599 = pneg %p246
        %p600 = pneg %p243
        %p601 = pneg %p267
        %p602 = pneg %p264
        %p603 = pneg %p288
        %p604 = pneg %p285
        %p605 = pneg %p309
        %p606 = pneg %p306
        %p607 = pneg %p335
        %p608 = pneg %p332
        %s609 = sand.u32 %s322, 1
        %s610 = scalar_lea.sflag [#allocation5], %s609
        %s611 = sand.u32 %s322, 1
        %s612 = smul.addr %s611, 8
        %s613 = scalar_lea.vmem [#allocation24], %s612
        %v615 = vld [vmem:[%s523] sm:$0xff]
        %v616 = vld [vmem:[#allocation6] sm:$0x1]
        %v617 = vld [vmem:[#allocation8] sm:$0x1]
        %vm618 = vcmask 261120
        %v619 = vsel %vm618, %v615, 0.0
        %620 = vadd.xlane.f32.xlu0 %v619
        %v621 = vpop.xlane.xlu0 %620
        %v622 = vrcp.pop 32.0
        %v623 = vmul.f32 %v621, %v622
        %v624 = vsub.f32 %v615, %v623
        %v625 = vmul.f32 %v624, %v624
        %v626 = vsel %vm618, %v625, 0.0
        %627 = vadd.xlane.f32.xlu0 %v626
        %v628 = vpop.xlane.xlu0 %627
        %v629 = vmul.f32 %v628, %v622
        %v630 = vadd.f32 %v629, 1e-05
        %v631 = vrsqrt.pop %v630
        %v632 = vmul.f32 %v624, %v631
        %v634 = vlaneseq
        %v635 = vshrl.u32 %v634, 7
        %v636 = vsub.s32 0, %v635
        %v637 = vrot.slane %v616, %v636
        %v639 = vmul.f32 %v632, %v637
        %v641 = vlaneseq
        %v642 = vshrl.u32 %v641, 7
        %v643 = vsub.s32 0, %v642
        %v644 = vrot.slane %v617, %v643
        %v646 = vadd.f32 %v639, %v644
        %v647 = vpack.c.bf16 %v646, %v646
        %v648 = vld [vmem:[#allocation9] sm:$0xf]
        %v649 = vld [vmem:[#allocation9 + $0x4] sm:$0xf]
        %v650 = vld [vmem:[#allocation9 + $0x8] sm:$0xf]
        %v651 = vld [vmem:[#allocation9 + $0xc] sm:$0xf]
        %v652 = vld [vmem:[#allocation11] sm:$0x1]
        %v654 = vlaneseq
        %v655 = vshrl.u32 %v654, 7
        %v656 = vsub.s32 0, %v655
        %v657 = vrot.slane %v652, %v656
        %v663 = vunpack.c.l.b16 %v648
        %v664 = vunpack.c.l.b16 %v649
        %v665 = vunpack.c.l.b16 %v650
        %v666 = vunpack.c.l.b16 %v651
        %v667 = vpack.c.b16 %v664, %v663
        %v668 = vpack.c.b16 %v666, %v665
        %v672 = vsel %vm618, %v647, 0
        %674 = vmatprep.subr.bf16.mxu0 0
        %675 = vmatpush1.bf16.msra.mxu0 %v667
        %676 = vmatprep.subr.bf16.mxu0 0
        %677 = vmatpush1.bf16.msra.mxu0 %v668
        %678 = vmatprep.subr.bf16.mxu0 0
        %679 = vmatpush1.bf16.msra.mxu0 0
        %680 = vmatprep.subr.bf16.mxu0 0
        %681 = vmatpush1.bf16.msra.mxu0 0
        %682 = vmatprep.subr.bf16.mxu0 0
        %683 = vmatpush1.bf16.msra.mxu0 0
        %684 = vmatprep.subr.bf16.mxu0 0
        %685 = vmatpush1.bf16.msra.mxu0 0
        %686 = vmatprep.subr.bf16.mxu0 0
        %687 = vmatpush1.bf16.msra.mxu0 0
        %688 = vmatprep.subr.bf16.mxu0 0
        %689 = vmatpush1.bf16.msra.mxu0 0
        %690 = vmatprep.subr.bf16.mxu0 0
        %691 = vmatpush1.bf16.msra.mxu0 0
        %692 = vmatprep.subr.bf16.mxu0 0
        %693 = vmatpush1.bf16.msra.mxu0 0
        %694 = vmatprep.subr.bf16.mxu0 0
        %695 = vmatpush1.bf16.msra.mxu0 0
        %696 = vmatprep.subr.bf16.mxu0 0
        %697 = vmatpush1.bf16.msra.mxu0 0
        %698 = vmatprep.subr.bf16.mxu0 0
        %699 = vmatpush1.bf16.msra.mxu0 0
        %700 = vmatprep.subr.bf16.mxu0 0
        %701 = vmatpush1.bf16.msra.mxu0 0
        %702 = vmatprep.subr.bf16.mxu0 0
        %703 = vmatpush1.bf16.msra.mxu0 0
        %704 = vmatprep.subr.bf16.mxu0 0
        %705 = vmatpush1.bf16.msra.mxu0 0
        %706 = vmatprep.mubr.bf16.mxu0 0
        %707 = vmatmul.mubr.bf16.gmra.mrb[0].mxu0 %v672
        %v708 = vpop.f32.mrb[0].mxu0
        %v709 = vadd.f32 %v657, %v708
        %v710 = vpop.f32.mrb[0].mxu0
        %v711 = vpop.f32.mrb[0].mxu0
        %v712 = vpop.f32.mrb[0].mxu0
        %713 = vdwg.mxu0
        %v714 = vlaneseq
        %v715 = vshrl.u32 %v714, 7
        %v716 = vlaneseq
        %v717 = vand.u32 %v716, 127
        %vm718 = vcmp.ge.s32.totalorder %v715, %v717
        %v719 = vpack.c.bf16 %v709, %v709
        %721 = vrot.lane.b32.xlu0 %v719, 96
        %v722 = vpop.permute.xlu0 %721
        %vm723 = vcmask 64512
        %v725 = vsel %vm723, %v719, 0
        %v728 = vsel %vm723, %v722, 0
        %730 = vmatprep.subr.bf16.mxu0 0
        %731 = vmatpush1.bf16.xpose.msra.mxu0 %v728
        %732 = vmatprep.subr.bf16.mxu0 0
        %733 = vmatpush1.bf16.xpose.msra.mxu0 0
        %734 = vmatprep.subr.bf16.mxu0 0
        %735 = vmatpush1.bf16.xpose.msra.mxu0 0
        %736 = vmatprep.subr.bf16.mxu0 0
        %737 = vmatpush1.bf16.xpose.msra.mxu0 0
        %738 = vmatprep.subr.bf16.mxu0 0
        %739 = vmatpush1.bf16.xpose.msra.mxu0 0
        %740 = vmatprep.subr.bf16.mxu0 0
        %741 = vmatpush1.bf16.xpose.msra.mxu0 0
        %742 = vmatprep.subr.bf16.mxu0 0
        %743 = vmatpush1.bf16.xpose.msra.mxu0 0
        %744 = vmatprep.subr.bf16.mxu0 0
        %745 = vmatpush1.bf16.xpose.msra.mxu0 0
        %746 = vmatprep.subr.bf16.mxu0 0
        %747 = vmatpush1.bf16.xpose.msra.mxu0 0
        %748 = vmatprep.subr.bf16.mxu0 0
        %749 = vmatpush1.bf16.xpose.msra.mxu0 0
        %750 = vmatprep.subr.bf16.mxu0 0
        %751 = vmatpush1.bf16.xpose.msra.mxu0 0
        %752 = vmatprep.subr.bf16.mxu0 0
        %753 = vmatpush1.bf16.xpose.msra.mxu0 0
        %754 = vmatprep.subr.bf16.mxu0 0
        %755 = vmatpush1.bf16.xpose.msra.mxu0 0
        %756 = vmatprep.subr.bf16.mxu0 0
        %757 = vmatpush1.bf16.xpose.msra.mxu0 0
        %758 = vmatprep.subr.bf16.mxu0 0
        %759 = vmatpush1.bf16.xpose.msra.mxu0 0
        %760 = vmatprep.subr.bf16.mxu0 0
        %761 = vmatpush1.bf16.xpose.msra.mxu0 0
        %762 = vmatprep.mubr.bf16.mxu0 0
        %763 = vmatmul.mubr.bf16.gmra.mrb[0].mxu0 %v725
        %v764 = vpop.f32.mrb[0].mxu0
        %v765 = vadd.f32 0.0, %v764
        %v766 = vpop.f32.mrb[0].mxu0
        %v767 = vpop.f32.mrb[0].mxu0
        %v768 = vpop.f32.mrb[0].mxu0
        %769 = vdwg.mxu0
        %v770 = vsel %vm718, %v765, -10000.0
        %v771 = vsel %vm723, %v770, -inf
        %772 = vmax.xlane.f32.xlu0 %v771
        %v773 = vpop.xlane.xlu0 %772
        %v774 = vsub.f32 %v770, %v773
        %v775 = vmul.f32 %v774, 1.442695
        %v776 = vpow.pop %v775
        %v777 = vsel %vm723, %v776, 0.0
        %778 = vadd.xlane.f32.xlu0 %v777
        %v779 = vpop.xlane.xlu0 %778
        %v780 = vrcp.pop %v779
        %v781 = vmul.f32 %v776, %v780
        %v782 = vpack.c.bf16 %v781, %v781
        %783 = vrot.lane.b32.xlu0 %v719, 64
        %v784 = vpop.permute.xlu0 %783
        %v786 = vsel %vm723, %v782, 0
        %vm788 = vcmask 1043456
        %v790 = vsel %vm788, %v784, 0
        %792 = vmatprep.subr.bf16.mxu0 0
        %793 = vmatpush1.bf16.msra.mxu0 %v790
        %794 = vmatprep.subr.bf16.mxu0 0
        %795 = vmatpush1.bf16.msra.mxu0 0
        %796 = vmatprep.subr.bf16.mxu0 0
        %797 = vmatpush1.bf16.msra.mxu0 0
        %798 = vmatprep.subr.bf16.mxu0 0
        %799 = vmatpush1.bf16.msra.mxu0 0
        %800 = vmatprep.subr.bf16.mxu0 0
        %801 = vmatpush1.bf16.msra.mxu0 0
        %802 = vmatprep.subr.bf16.mxu0 0
        %803 = vmatpush1.bf16.msra.mxu0 0
        %804 = vmatprep.subr.bf16.mxu0 0
        %805 = vmatpush1.bf16.msra.mxu0 0
        %806 = vmatprep.subr.bf16.mxu0 0
        %807 = vmatpush1.bf16.msra.mxu0 0
        %808 = vmatprep.subr.bf16.mxu0 0
        %809 = vmatpush1.bf16.msra.mxu0 0
        %810 = vmatprep.subr.bf16.mxu0 0
        %811 = vmatpush1.bf16.msra.mxu0 0
        %812 = vmatprep.subr.bf16.mxu0 0
        %813 = vmatpush1.bf16.msra.mxu0 0
        %814 = vmatprep.subr.bf16.mxu0 0
        %815 = vmatpush1.bf16.msra.mxu0 0
        %816 = vmatprep.subr.bf16.mxu0 0
        %817 = vmatpush1.bf16.msra.mxu0 0
        %818 = vmatprep.subr.bf16.mxu0 0
        %819 = vmatpush1.bf16.msra.mxu0 0
        %820 = vmatprep.subr.bf16.mxu0 0
        %821 = vmatpush1.bf16.msra.mxu0 0
        %822 = vmatprep.subr.bf16.mxu0 0
        %823 = vmatpush1.bf16.msra.mxu0 0
        %824 = vmatprep.mubr.bf16.mxu0 0
        %825 = vmatmul.mubr.bf16.gmra.mrb[0].mxu0 %v786
        %v826 = vpop.f32.mrb[0].mxu0
        %v827 = vadd.f32 0.0, %v826
        %v828 = vpop.f32.mrb[0].mxu0
        %v829 = vpop.f32.mrb[0].mxu0
        %v830 = vpop.f32.mrb[0].mxu0
        %831 = vdwg.mxu0
        %v832 = vpack.c.bf16 %v827, %v827
        %vm833 = vcmask 60416
        %834 = vst.msk [vmem:[#allocation2] sm:$0xf] %vm833, %v832
        %835 = vrot.lane.b32.xlu0 %v719, 120
        %v836 = vpop.permute.xlu0 %835
        %837 = vrot.lane.b32.xlu0 %v719, 88
        %v838 = vpop.permute.xlu0 %837
        %v840 = vsel %vm723, %v836, 0
        %v843 = vsel %vm723, %v838, 0
        %845 = vmatprep.subr.bf16.mxu0 0
        %846 = vmatpush1.bf16.xpose.msra.mxu0 %v843
        %847 = vmatprep.subr.bf16.mxu0 0
        %848 = vmatpush1.bf16.xpose.msra.mxu0 0
        %849 = vmatprep.subr.bf16.mxu0 0
        %850 = vmatpush1.bf16.xpose.msra.mxu0 0
        %851 = vmatprep.subr.bf16.mxu0 0
        %852 = vmatpush1.bf16.xpose.msra.mxu0 0
        %853 = vmatprep.subr.bf16.mxu0 0
        %854 = vmatpush1.bf16.xpose.msra.mxu0 0
        %855 = vmatprep.subr.bf16.mxu0 0
        %856 = vmatpush1.bf16.xpose.msra.mxu0 0
        %857 = vmatprep.subr.bf16.mxu0 0
        %858 = vmatpush1.bf16.xpose.msra.mxu0 0
        %859 = vmatprep.subr.bf16.mxu0 0
        %860 = vmatpush1.bf16.xpose.msra.mxu0 0
        %861 = vmatprep.subr.bf16.mxu0 0
        %862 = vmatpush1.bf16.xpose.msra.mxu0 0
        %863 = vmatprep.subr.bf16.mxu0 0
        %864 = vmatpush1.bf16.xpose.msra.mxu0 0
        %865 = vmatprep.subr.bf16.mxu0 0
        %866 = vmatpush1.bf16.xpose.msra.mxu0 0
        %867 = vmatprep.subr.bf16.mxu0 0
        %868 = vmatpush1.bf16.xpose.msra.mxu0 0
        %869 = vmatprep.subr.bf16.mxu0 0
        %870 = vmatpush1.bf16.xpose.msra.mxu0 0
        %871 = vmatprep.subr.bf16.mxu0 0
        %872 = vmatpush1.bf16.xpose.msra.mxu0 0
        %873 = vmatprep.subr.bf16.mxu0 0
        %874 = vmatpush1.bf16.xpose.msra.mxu0 0
        %875 = vmatprep.subr.bf16.mxu0 0
        %876 = vmatpush1.bf16.xpose.msra.mxu0 0
        %877 = vmatprep.mubr.bf16.mxu0 0
        %878 = vmatmul.mubr.bf16.gmra.mrb[0].mxu0 %v840
        %v879 = vpop.f32.mrb[0].mxu0
        %v880 = vadd.f32 0.0, %v879
        %v881 = vpop.f32.mrb[0].mxu0
        %v882 = vpop.f32.mrb[0].mxu0
        %v883 = vpop.f32.mrb[0].mxu0
        %884 = vdwg.mxu0
        %v885 = vsel %vm718, %v880, -10000.0
        %v886 = vsel %vm723, %v885, -inf
        %887 = vmax.xlane.f32.xlu0 %v886
        %v888 = vpop.xlane.xlu0 %887
        %v889 = vsub.f32 %v885, %v888
        %v890 = vmul.f32 %v889, 1.442695
        %v891 = vpow.pop %v890
        %v892 = vsel %vm723, %v891, 0.0
        %893 = vadd.xlane.f32.xlu0 %v892
        %v894 = vpop.xlane.xlu0 %893
        %v895 = vrcp.pop %v894
        %v896 = vmul.f32 %v891, %v895
        %v897 = vpack.c.bf16 %v896, %v896
        %898 = vrot.lane.b32.xlu0 %v719, 56
        %v899 = vpop.permute.xlu0 %898
        %v901 = vsel %vm723, %v897, 0
        %v904 = vsel %vm788, %v899, 0
        %906 = vmatprep.subr.bf16.mxu0 0
        %907 = vmatpush1.bf16.msra.mxu0 %v904
        %908 = vmatprep.subr.bf16.mxu0 0
        %909 = vmatpush1.bf16.msra.mxu0 0
        %910 = vmatprep.subr.bf16.mxu0 0
        %911 = vmatpush1.bf16.msra.mxu0 0
        %912 = vmatprep.subr.bf16.mxu0 0
        %913 = vmatpush1.bf16.msra.mxu0 0
        %914 = vmatprep.subr.bf16.mxu0 0
        %915 = vmatpush1.bf16.msra.mxu0 0
        %916 = vmatprep.subr.bf16.mxu0 0
        %917 = vmatpush1.bf16.msra.mxu0 0
        %918 = vmatprep.subr.bf16.mxu0 0
        %919 = vmatpush1.bf16.msra.mxu0 0
        %920 = vmatprep.subr.bf16.mxu0 0
        %921 = vmatpush1.bf16.msra.mxu0 0
        %922 = vmatprep.subr.bf16.mxu0 0
        %923 = vmatpush1.bf16.msra.mxu0 0
        %924 = vmatprep.subr.bf16.mxu0 0
        %925 = vmatpush1.bf16.msra.mxu0 0
        %926 = vmatprep.subr.bf16.mxu0 0
        %927 = vmatpush1.bf16.msra.mxu0 0
        %928 = vmatprep.subr.bf16.mxu0 0
        %929 = vmatpush1.bf16.msra.mxu0 0
        %930 = vmatprep.subr.bf16.mxu0 0
        %931 = vmatpush1.bf16.msra.mxu0 0
        %932 = vmatprep.subr.bf16.mxu0 0
        %933 = vmatpush1.bf16.msra.mxu0 0
        %934 = vmatprep.subr.bf16.mxu0 0
        %935 = vmatpush1.bf16.msra.mxu0 0
        %936 = vmatprep.subr.bf16.mxu0 0
        %937 = vmatpush1.bf16.msra.mxu0 0
        %938 = vmatprep.mubr.bf16.mxu0 0
        %939 = vmatmul.mubr.bf16.gmra.mrb[0].mxu0 %v901
        %v940 = vpop.f32.mrb[0].mxu0
        %v941 = vadd.f32 0.0, %v940
        %v942 = vpop.f32.mrb[0].mxu0
        %v943 = vpop.f32.mrb[0].mxu0
        %v944 = vpop.f32.mrb[0].mxu0
        %945 = vdwg.mxu0
        %v946 = vpack.c.bf16 %v941, %v941
        %v948 = vunpack.c.l.b16 %v946
        %v949 = vpack.c.b16 %v948, %v948
        %950 = vrot.lane.b32.xlu0 %v949, 8
        %v951 = vpop.permute.xlu0 %950
        %vm953 = vcmask 126016
        %954 = vst.msk [vmem:[#allocation2] sm:$0xf] %vm953, %v951
        %955 = vrot.lane.b32.xlu0 %v719, 112
        %v956 = vpop.permute.xlu0 %955
        %957 = vrot.lane.b32.xlu0 %v719, 80
        %v958 = vpop.permute.xlu0 %957
        %v960 = vsel %vm723, %v956, 0
        %v963 = vsel %vm723, %v958, 0
        %965 = vmatprep.subr.bf16.mxu0 0
        %966 = vmatpush1.bf16.xpose.msra.mxu0 %v963
        %967 = vmatprep.subr.bf16.mxu0 0
        %968 = vmatpush1.bf16.xpose.msra.mxu0 0
        %969 = vmatprep.subr.bf16.mxu0 0
        %970 = vmatpush1.bf16.xpose.msra.mxu0 0
        %971 = vmatprep.subr.bf16.mxu0 0
        %972 = vmatpush1.bf16.xpose.msra.mxu0 0
        %973 = vmatprep.subr.bf16.mxu0 0
        %974 = vmatpush1.bf16.xpose.msra.mxu0 0
        %975 = vmatprep.subr.bf16.mxu0 0
        %976 = vmatpush1.bf16.xpose.msra.mxu0 0
        %977 = vmatprep.subr.bf16.mxu0 0
        %978 = vmatpush1.bf16.xpose.msra.mxu0 0
        %979 = vmatprep.subr.bf16.mxu0 0
        %980 = vmatpush1.bf16.xpose.msra.mxu0 0
        %981 = vmatprep.subr.bf16.mxu0 0
        %982 = vmatpush1.bf16.xpose.msra.mxu0 0
        %983 = vmatprep.subr.bf16.mxu0 0
        %984 = vmatpush1.bf16.xpose.msra.mxu0 0
        %985 = vmatprep.subr.bf16.mxu0 0
        %986 = vmatpush1.bf16.xpose.msra.mxu0 0
        %987 = vmatprep.subr.bf16.mxu0 0
        %988 = vmatpush1.bf16.xpose.msra.mxu0 0
        %989 = vmatprep.subr.bf16.mxu0 0
        %990 = vmatpush1.bf16.xpose.msra.mxu0 0
        %991 = vmatprep.subr.bf16.mxu0 0
        %992 = vmatpush1.bf16.xpose.msra.mxu0 0
        %993 = vmatprep.subr.bf16.mxu0 0
        %994 = vmatpush1.bf16.xpose.msra.mxu0 0
        %995 = vmatprep.subr.bf16.mxu0 0
        %996 = vmatpush1.bf16.xpose.msra.mxu0 0
        %997 = vmatprep.mubr.bf16.mxu0 0
        %998 = vmatmul.mubr.bf16.gmra.mrb[0].mxu0 %v960
        %v999 = vpop.f32.mrb[0].mxu0
        %v1000 = vadd.f32 0.0, %v999
        %v1001 = vpop.f32.mrb[0].mxu0
        %v1002 = vpop.f32.mrb[0].mxu0
        %v1003 = vpop.f32.mrb[0].mxu0
        %1004 = vdwg.mxu0
        %v1005 = vsel %vm718, %v1000, -10000.0
        %v1006 = vsel %vm723, %v1005, -inf
        %1007 = vmax.xlane.f32.xlu0 %v1006
        %v1008 = vpop.xlane.xlu0 %1007
        %v1009 = vsub.f32 %v1005, %v1008
        %v1010 = vmul.f32 %v1009, 1.442695
        %v1011 = vpow.pop %v1010
        %v1012 = vsel %vm723, %v1011, 0.0
        %1013 = vadd.xlane.f32.xlu0 %v1012
        %v1014 = vpop.xlane.xlu0 %1013
        %v1015 = vrcp.pop %v1014
        %v1016 = vmul.f32 %v1011, %v1015
        %v1017 = vpack.c.bf16 %v1016, %v1016
        %1018 = vrot.lane.b32.xlu0 %v719, 48
        %v1019 = vpop.permute.xlu0 %1018
        %v1021 = vsel %vm723, %v1017, 0
        %v1024 = vsel %vm788, %v1019, 0
        %1026 = vmatprep.subr.bf16.mxu0 0
        %1027 = vmatpush1.bf16.msra.mxu0 %v1024
        %1028 = vmatprep.subr.bf16.mxu0 0
        %1029 = vmatpush1.bf16.msra.mxu0 0
        %1030 = vmatprep.subr.bf16.mxu0 0
        %1031 = vmatpush1.bf16.msra.mxu0 0
        %1032 = vmatprep.subr.bf16.mxu0 0
        %1033 = vmatpush1.bf16.msra.mxu0 0
        %1034 = vmatprep.subr.bf16.mxu0 0
        %1035 = vmatpush1.bf16.msra.mxu0 0
        %1036 = vmatprep.subr.bf16.mxu0 0
        %1037 = vmatpush1.bf16.msra.mxu0 0
        %1038 = vmatprep.subr.bf16.mxu0 0
        %1039 = vmatpush1.bf16.msra.mxu0 0
        %1040 = vmatprep.subr.bf16.mxu0 0
        %1041 = vmatpush1.bf16.msra.mxu0 0
        %1042 = vmatprep.subr.bf16.mxu0 0
        %1043 = vmatpush1.bf16.msra.mxu0 0
        %1044 = vmatprep.subr.bf16.mxu0 0
        %1045 = vmatpush1.bf16.msra.mxu0 0
        %1046 = vmatprep.subr.bf16.mxu0 0
        %1047 = vmatpush1.bf16.msra.mxu0 0
        %1048 = vmatprep.subr.bf16.mxu0 0
        %1049 = vmatpush1.bf16.msra.mxu0 0
        %1050 = vmatprep.subr.bf16.mxu0 0
        %1051 = vmatpush1.bf16.msra.mxu0 0
        %1052 = vmatprep.subr.bf16.mxu0 0
        %1053 = vmatpush1.bf16.msra.mxu0 0
        %1054 = vmatprep.subr.bf16.mxu0 0
        %1055 = vmatpush1.bf16.msra.mxu0 0
        %1056 = vmatprep.subr.bf16.mxu0 0
        %1057 = vmatpush1.bf16.msra.mxu0 0
        %1058 = vmatprep.mubr.bf16.mxu0 0
        %1059 = vmatmul.mubr.bf16.gmra.mrb[0].mxu0 %v1021
        %v1060 = vpop.f32.mrb[0].mxu0
        %v1061 = vadd.f32 0.0, %v1060
        %v1062 = vpop.f32.mrb[0].mxu0
        %v1063 = vpop.f32.mrb[0].mxu0
        %v1064 = vpop.f32.mrb[0].mxu0
        %1065 = vdwg.mxu0
        %v1066 = vpack.c.bf16 %v1061, %v1061
        %v1068 = vunpack.c.l.b16 %v1066
        %v1069 = vpack.c.b16 %v1068, %v1068
        %1070 = vrot.lane.b32.xlu0 %v1069, 16
        %v1071 = vpop.permute.xlu0 %1070
        %vm1073 = vcmask 191616
        %1074 = vst.msk [vmem:[#allocation2] sm:$0xf] %vm1073, %v1071
        %1075 = vrot.lane.b32.xlu0 %v719, 104
        %v1076 = vpop.permute.xlu0 %1075
        %1077 = vrot.lane.b32.xlu0 %v719, 72
        %v1078 = vpop.permute.xlu0 %1077
        %v1080 = vsel %vm723, %v1076, 0
        %v1083 = vsel %vm723, %v1078, 0
        %1085 = vmatprep.subr.bf16.mxu0 0
        %1086 = vmatpush1.bf16.xpose.msra.mxu0 %v1083
        %1087 = vmatprep.subr.bf16.mxu0 0
        %1088 = vmatpush1.bf16.xpose.msra.mxu0 0
        %1089 = vmatprep.subr.bf16.mxu0 0
        %1090 = vmatpush1.bf16.xpose.msra.mxu0 0
        %1091 = vmatprep.subr.bf16.mxu0 0
        %1092 = vmatpush1.bf16.xpose.msra.mxu0 0
        %1093 = vmatprep.subr.bf16.mxu0 0
        %1094 = vmatpush1.bf16.xpose.msra.mxu0 0
        %1095 = vmatprep.subr.bf16.mxu0 0
        %1096 = vmatpush1.bf16.xpose.msra.mxu0 0
        %1097 = vmatprep.subr.bf16.mxu0 0
        %1098 = vmatpush1.bf16.xpose.msra.mxu0 0
        %1099 = vmatprep.subr.bf16.mxu0 0
        %1100 = vmatpush1.bf16.xpose.msra.mxu0 0
        %1101 = vmatprep.subr.bf16.mxu0 0
        %1102 = vmatpush1.bf16.xpose.msra.mxu0 0
        %1103 = vmatprep.subr.bf16.mxu0 0
        %1104 = vmatpush1.bf16.xpose.msra.mxu0 0
        %1105 = vmatprep.subr.bf16.mxu0 0
        %1106 = vmatpush1.bf16.xpose.msra.mxu0 0
        %1107 = vmatprep.subr.bf16.mxu0 0
        %1108 = vmatpush1.bf16.xpose.msra.mxu0 0
        %1109 = vmatprep.subr.bf16.mxu0 0
        %1110 = vmatpush1.bf16.xpose.msra.mxu0 0
        %1111 = vmatprep.subr.bf16.mxu0 0
        %1112 = vmatpush1.bf16.xpose.msra.mxu0 0
        %1113 = vmatprep.subr.bf16.mxu0 0
        %1114 = vmatpush1.bf16.xpose.msra.mxu0 0
        %1115 = vmatprep.subr.bf16.mxu0 0
        %1116 = vmatpush1.bf16.xpose.msra.mxu0 0
        %1117 = vmatprep.mubr.bf16.mxu0 0
        %1118 = vmatmul.mubr.bf16.gmra.mrb[0].mxu0 %v1080
        %v1119 = vpop.f32.mrb[0].mxu0
        %v1120 = vadd.f32 0.0, %v1119
        %v1121 = vpop.f32.mrb[0].mxu0
        %v1122 = vpop.f32.mrb[0].mxu0
        %v1123 = vpop.f32.mrb[0].mxu0
        %1124 = vdwg.mxu0
        %v1125 = vsel %vm718, %v1120, -10000.0
        %v1126 = vsel %vm723, %v1125, -inf
        %1127 = vmax.xlane.f32.xlu0 %v1126
        %v1128 = vpop.xlane.xlu0 %1127
        %v1129 = vsub.f32 %v1125, %v1128
        %v1130 = vmul.f32 %v1129, 1.442695
        %v1131 = vpow.pop %v1130
        %v1132 = vsel %vm723, %v1131, 0.0
        %1133 = vadd.xlane.f32.xlu0 %v1132
        %v1134 = vpop.xlane.xlu0 %1133
        %v1135 = vrcp.pop %v1134
        %v1136 = vmul.f32 %v1131, %v1135
        %v1137 = vpack.c.bf16 %v1136, %v1136
        %1138 = vrot.lane.b32.xlu0 %v719, 40
        %v1139 = vpop.permute.xlu0 %1138
        %v1141 = vsel %vm723, %v1137, 0
        %v1144 = vsel %vm788, %v1139, 0
        %1146 = vmatprep.subr.bf16.mxu0 0
        %1147 = vmatpush1.bf16.msra.mxu0 %v1144
        %1148 = vmatprep.subr.bf16.mxu0 0
        %1149 = vmatpush1.bf16.msra.mxu0 0
        %1150 = vmatprep.subr.bf16.mxu0 0
        %1151 = vmatpush1.bf16.msra.mxu0 0
        %1152 = vmatprep.subr.bf16.mxu0 0
        %1153 = vmatpush1.bf16.msra.mxu0 0
        %1154 = vmatprep.subr.bf16.mxu0 0
        %1155 = vmatpush1.bf16.msra.mxu0 0
        %1156 = vmatprep.subr.bf16.mxu0 0
        %1157 = vmatpush1.bf16.msra.mxu0 0
        %1158 = vmatprep.subr.bf16.mxu0 0
        %1159 = vmatpush1.bf16.msra.mxu0 0
        %1160 = vmatprep.subr.bf16.mxu0 0
        %1161 = vmatpush1.bf16.msra.mxu0 0
        %1162 = vmatprep.subr.bf16.mxu0 0
        %1163 = vmatpush1.bf16.msra.mxu0 0
        %1164 = vmatprep.subr.bf16.mxu0 0
        %1165 = vmatpush1.bf16.msra.mxu0 0
        %1166 = vmatprep.subr.bf16.mxu0 0
        %1167 = vmatpush1.bf16.msra.mxu0 0
        %1168 = vmatprep.subr.bf16.mxu0 0
        %1169 = vmatpush1.bf16.msra.mxu0 0
        %1170 = vmatprep.subr.bf16.mxu0 0
        %1171 = vmatpush1.bf16.msra.mxu0 0
        %1172 = vmatprep.subr.bf16.mxu0 0
        %1173 = vmatpush1.bf16.msra.mxu0 0
        %1174 = vmatprep.subr.bf16.mxu0 0
        %1175 = vmatpush1.bf16.msra.mxu0 0
        %1176 = vmatprep.subr.bf16.mxu0 0
        %1177 = vmatpush1.bf16.msra.mxu0 0
        %1178 = vmatprep.mubr.bf16.mxu0 0
        %1179 = vmatmul.mubr.bf16.gmra.mrb[0].mxu0 %v1141
        %v1180 = vpop.f32.mrb[0].mxu0
        %v1181 = vadd.f32 0.0, %v1180
        %v1182 = vpop.f32.mrb[0].mxu0
        %v1183 = vpop.f32.mrb[0].mxu0
        %v1184 = vpop.f32.mrb[0].mxu0
        %1185 = vdwg.mxu0
        %v1186 = vpack.c.bf16 %v1181, %v1181
        %v1188 = vunpack.c.l.b16 %v1186
        %v1189 = vpack.c.b16 %v1188, %v1188
        %1190 = vrot.lane.b32.xlu0 %v1189, 24
        %v1191 = vpop.permute.xlu0 %1190
        %vm1193 = vcmask 257216
        %1194 = vst.msk [vmem:[#allocation2] sm:$0xf] %vm1193, %v1191
        %v1195 = vld [vmem:[#allocation2] sm:$0xf]
        %v1196 = vld [vmem:[#allocation12] sm:$0xf]
        %v1197 = vld [vmem:[#allocation12 + $0x4] sm:$0xf]
        %v1198 = vld [vmem:[#allocation12 + $0x8] sm:$0xf]
        %v1199 = vld [vmem:[#allocation12 + $0xc] sm:$0xf]
        %v1200 = vld [vmem:[#allocation14] sm:$0x1]
        %v1202 = vlaneseq
        %v1203 = vshrl.u32 %v1202, 7
        %v1204 = vsub.s32 0, %v1203
        %v1205 = vrot.slane %v1200, %v1204
        %v1211 = vunpack.c.l.b16 %v1196
        %v1212 = vunpack.c.l.b16 %v1197
        %v1213 = vunpack.c.l.b16 %v1198
        %v1214 = vunpack.c.l.b16 %v1199
        %v1215 = vpack.c.b16 %v1212, %v1211
        %v1216 = vpack.c.b16 %v1214, %v1213
        %v1220 = vsel %vm618, %v1195, 0
        %1222 = vmatprep.subr.bf16.mxu0 0
        %1223 = vmatpush1.bf16.msra.mxu0 %v1215
        %1224 = vmatprep.subr.bf16.mxu0 0
        %1225 = vmatpush1.bf16.msra.mxu0 %v1216
        %1226 = vmatprep.subr.bf16.mxu0 0
        %1227 = vmatpush1.bf16.msra.mxu0 0
        %1228 = vmatprep.subr.bf16.mxu0 0
        %1229 = vmatpush1.bf16.msra.mxu0 0
        %1230 = vmatprep.subr.bf16.mxu0 0
        %1231 = vmatpush1.bf16.msra.mxu0 0
        %1232 = vmatprep.subr.bf16.mxu0 0
        %1233 = vmatpush1.bf16.msra.mxu0 0
        %1234 = vmatprep.subr.bf16.mxu0 0
        %1235 = vmatpush1.bf16.msra.mxu0 0
        %1236 = vmatprep.subr.bf16.mxu0 0
        %1237 = vmatpush1.bf16.msra.mxu0 0
        %1238 = vmatprep.subr.bf16.mxu0 0
        %1239 = vmatpush1.bf16.msra.mxu0 0
        %1240 = vmatprep.subr.bf16.mxu0 0
        %1241 = vmatpush1.bf16.msra.mxu0 0
        %1242 = vmatprep.subr.bf16.mxu0 0
        %1243 = vmatpush1.bf16.msra.mxu0 0
        %1244 = vmatprep.subr.bf16.mxu0 0
        %1245 = vmatpush1.bf16.msra.mxu0 0
        %1246 = vmatprep.subr.bf16.mxu0 0
        %1247 = vmatpush1.bf16.msra.mxu0 0
        %1248 = vmatprep.subr.bf16.mxu0 0
        %1249 = vmatpush1.bf16.msra.mxu0 0
        %1250 = vmatprep.subr.bf16.mxu0 0
        %1251 = vmatpush1.bf16.msra.mxu0 0
        %1252 = vmatprep.subr.bf16.mxu0 0
        %1253 = vmatpush1.bf16.msra.mxu0 0
        %1254 = vmatprep.mubr.bf16.mxu0 0
        %1255 = vmatmul.mubr.bf16.gmra.mrb[0].mxu0 %v1220
        %v1256 = vpop.f32.mrb[0].mxu0
        %v1257 = vadd.f32 %v1205, %v1256
        %v1258 = vpop.f32.mrb[0].mxu0
        %v1259 = vpop.f32.mrb[0].mxu0
        %v1260 = vpop.f32.mrb[0].mxu0
        %1261 = vdwg.mxu0
        %v1262 = vadd.f32 %v615, %v1257
        %v1263 = vld [vmem:[#allocation15] sm:$0x1]
        %v1264 = vld [vmem:[#allocation17] sm:$0x1]
        %v1265 = vsel %vm618, %v1262, 0.0
        %1266 = vadd.xlane.f32.xlu0 %v1265
        %v1267 = vpop.xlane.xlu0 %1266
        %v1268 = vmul.f32 %v1267, %v622
        %v1269 = vsub.f32 %v1262, %v1268
        %v1270 = vmul.f32 %v1269, %v1269
        %v1271 = vsel %vm618, %v1270, 0.0
        %1272 = vadd.xlane.f32.xlu0 %v1271
        %v1273 = vpop.xlane.xlu0 %1272
        %v1274 = vmul.f32 %v1273, %v622
        %v1275 = vadd.f32 %v1274, 1e-05
        %v1276 = vrsqrt.pop %v1275
        %v1277 = vmul.f32 %v1269, %v1276
        %v1279 = vlaneseq
        %v1280 = vshrl.u32 %v1279, 7
        %v1281 = vsub.s32 0, %v1280
        %v1282 = vrot.slane %v1263, %v1281
        %v1284 = vmul.f32 %v1277, %v1282
        %v1286 = vlaneseq
        %v1287 = vshrl.u32 %v1286, 7
        %v1288 = vsub.s32 0, %v1287
        %v1289 = vrot.slane %v1264, %v1288
        %v1291 = vadd.f32 %v1284, %v1289
        %v1292 = vpack.c.bf16 %v1291, %v1291
        %v1293 = vld [vmem:[#allocation18] sm:$0xf]
        %v1294 = vld [vmem:[#allocation18 + $0x4] sm:$0xf]
        %v1295 = vld [vmem:[#allocation18 + $0x8] sm:$0xf]
        %v1296 = vld [vmem:[#allocation18 + $0xc] sm:$0xf]
        %v1297 = vld [vmem:[#allocation20] sm:$0x1]
        %v1299 = vlaneseq
        %v1300 = vshrl.u32 %v1299, 7
        %v1301 = vsub.s32 0, %v1300
        %v1302 = vrot.slane %v1297, %v1301
        %v1308 = vunpack.c.l.b16 %v1293
        %v1309 = vunpack.c.l.b16 %v1294
        %v1310 = vunpack.c.l.b16 %v1295
        %v1311 = vunpack.c.l.b16 %v1296
        %v1312 = vpack.c.b16 %v1309, %v1308
        %v1313 = vpack.c.b16 %v1311, %v1310
        %v1317 = vsel %vm618, %v1292, 0
        %1319 = vmatprep.subr.bf16.mxu0 0
        %1320 = vmatpush1.bf16.msra.mxu0 %v1312
        %1321 = vmatprep.subr.bf16.mxu0 0
        %1322 = vmatpush1.bf16.msra.mxu0 %v1313
        %1323 = vmatprep.subr.bf16.mxu0 0
        %1324 = vmatpush1.bf16.msra.mxu0 0
        %1325 = vmatprep.subr.bf16.mxu0 0
        %1326 = vmatpush1.bf16.msra.mxu0 0
        %1327 = vmatprep.subr.bf16.mxu0 0
        %1328 = vmatpush1.bf16.msra.mxu0 0
        %1329 = vmatprep.subr.bf16.mxu0 0
        %1330 = vmatpush1.bf16.msra.mxu0 0
        %1331 = vmatprep.subr.bf16.mxu0 0
        %1332 = vmatpush1.bf16.msra.mxu0 0
        %1333 = vmatprep.subr.bf16.mxu0 0
        %1334 = vmatpush1.bf16.msra.mxu0 0
        %1335 = vmatprep.subr.bf16.mxu0 0
        %1336 = vmatpush1.bf16.msra.mxu0 0
        %1337 = vmatprep.subr.bf16.mxu0 0
        %1338 = vmatpush1.bf16.msra.mxu0 0
        %1339 = vmatprep.subr.bf16.mxu0 0
        %1340 = vmatpush1.bf16.msra.mxu0 0
        %1341 = vmatprep.subr.bf16.mxu0 0
        %1342 = vmatpush1.bf16.msra.mxu0 0
        %1343 = vmatprep.subr.bf16.mxu0 0
        %1344 = vmatpush1.bf16.msra.mxu0 0
        %1345 = vmatprep.subr.bf16.mxu0 0
        %1346 = vmatpush1.bf16.msra.mxu0 0
        %1347 = vmatprep.subr.bf16.mxu0 0
        %1348 = vmatpush1.bf16.msra.mxu0 0
        %1349 = vmatprep.subr.bf16.mxu0 0
        %1350 = vmatpush1.bf16.msra.mxu0 0
        %1351 = vmatprep.mubr.bf16.mxu0 0
        %1352 = vmatmul.mubr.bf16.gmra.mrb[0].mxu0 %v1317
        %v1353 = vpop.f32.mrb[0].mxu0
        %v1354 = vadd.f32 %v1302, %v1353
        %v1355 = vpop.f32.mrb[0].mxu0
        %v1356 = vpop.f32.mrb[0].mxu0
        %v1357 = vpop.f32.mrb[0].mxu0
        %1358 = vdwg.mxu0
        %v1359 = vmul.f32 %v1354, 0.5
        %v1360 = vmul.f32 %v1354, 0.044715
        %v1361 = vmul.f32 %v1360, %v1354
        %v1362 = vmul.f32 %v1361, %v1354
        %v1363 = vadd.f32 %v1354, %v1362
        %v1364 = vmul.f32 %v1363, 0.7978846
        %v1365 = vtanh.pop %v1364
        %v1366 = vadd.f32 %v1365, 1.0
        %v1367 = vmul.f32 %v1359, %v1366
        %v1368 = vpack.c.bf16 %v1367, %v1367
        %v1369 = vld [vmem:[#allocation21] sm:$0xf]
        %v1370 = vld [vmem:[#allocation21 + $0x4] sm:$0xf]
        %v1371 = vld [vmem:[#allocation21 + $0x8] sm:$0xf]
        %v1372 = vld [vmem:[#allocation21 + $0xc] sm:$0xf]
        %v1373 = vld [vmem:[#allocation21 + $0x10] sm:$0xf]
        %v1374 = vld [vmem:[#allocation21 + $0x14] sm:$0xf]
        %v1375 = vld [vmem:[#allocation21 + $0x18] sm:$0xf]
        %v1376 = vld [vmem:[#allocation21 + $0x1c] sm:$0xf]
        %v1377 = vld [vmem:[#allocation21 + $0x20] sm:$0xf]
        %v1378 = vld [vmem:[#allocation21 + $0x24] sm:$0xf]
        %v1379 = vld [vmem:[#allocation21 + $0x28] sm:$0xf]
        %v1380 = vld [vmem:[#allocation21 + $0x2c] sm:$0xf]
        %v1381 = vld [vmem:[#allocation21 + $0x30] sm:$0xf]
        %v1382 = vld [vmem:[#allocation21 + $0x34] sm:$0xf]
        %v1383 = vld [vmem:[#allocation21 + $0x38] sm:$0xf]
        %v1384 = vld [vmem:[#allocation21 + $0x3c] sm:$0xf]
        %v1385 = vld [vmem:[#allocation23] sm:$0x1]
        %v1387 = vlaneseq
        %v1388 = vshrl.u32 %v1387, 7
        %v1389 = vsub.s32 0, %v1388
        %v1390 = vrot.slane %v1385, %v1389
        %v1408 = vunpack.c.l.b16 %v1369
        %v1409 = vunpack.c.l.b16 %v1370
        %v1410 = vunpack.c.l.b16 %v1371
        %v1411 = vunpack.c.l.b16 %v1372
        %v1412 = vunpack.c.l.b16 %v1373
        %v1413 = vunpack.c.l.b16 %v1374
        %v1414 = vunpack.c.l.b16 %v1375
        %v1415 = vunpack.c.l.b16 %v1376
        %v1416 = vunpack.c.l.b16 %v1377
        %v1417 = vunpack.c.l.b16 %v1378
        %v1418 = vunpack.c.l.b16 %v1379
        %v1419 = vunpack.c.l.b16 %v1380
        %v1420 = vunpack.c.l.b16 %v1381
        %v1421 = vunpack.c.l.b16 %v1382
        %v1422 = vunpack.c.l.b16 %v1383
        %v1423 = vunpack.c.l.b16 %v1384
        %v1424 = vpack.c.b16 %v1409, %v1408
        %v1425 = vpack.c.b16 %v1411, %v1410
        %v1426 = vpack.c.b16 %v1413, %v1412
        %v1427 = vpack.c.b16 %v1415, %v1414
        %v1428 = vpack.c.b16 %v1417, %v1416
        %v1429 = vpack.c.b16 %v1419, %v1418
        %v1430 = vpack.c.b16 %v1421, %v1420
        %v1431 = vpack.c.b16 %v1423, %v1422
        %1440 = vmatprep.subr.bf16.mxu0 0
        %1441 = vmatpush1.bf16.msra.mxu0 %v1424
        %1442 = vmatprep.subr.bf16.mxu0 0
        %1443 = vmatpush1.bf16.msra.mxu0 %v1425
        %1444 = vmatprep.subr.bf16.mxu0 0
        %1445 = vmatpush1.bf16.msra.mxu0 %v1426
        %1446 = vmatprep.subr.bf16.mxu0 0
        %1447 = vmatpush1.bf16.msra.mxu0 %v1427
        %1448 = vmatprep.subr.bf16.mxu0 0
        %1449 = vmatpush1.bf16.msra.mxu0 %v1428
        %1450 = vmatprep.subr.bf16.mxu0 0
        %1451 = vmatpush1.bf16.msra.mxu0 %v1429
        %1452 = vmatprep.subr.bf16.mxu0 0
        %1453 = vmatpush1.bf16.msra.mxu0 %v1430
        %1454 = vmatprep.subr.bf16.mxu0 0
        %1455 = vmatpush1.bf16.msra.mxu0 %v1431
        %1456 = vmatprep.subr.bf16.mxu0 0
        %1457 = vmatpush1.bf16.msra.mxu0 0
        %1458 = vmatprep.subr.bf16.mxu0 0
        %1459 = vmatpush1.bf16.msra.mxu0 0
        %1460 = vmatprep.subr.bf16.mxu0 0
        %1461 = vmatpush1.bf16.msra.mxu0 0
        %1462 = vmatprep.subr.bf16.mxu0 0
        %1463 = vmatpush1.bf16.msra.mxu0 0
        %1464 = vmatprep.subr.bf16.mxu0 0
        %1465 = vmatpush1.bf16.msra.mxu0 0
        %1466 = vmatprep.subr.bf16.mxu0 0
        %1467 = vmatpush1.bf16.msra.mxu0 0
        %1468 = vmatprep.subr.bf16.mxu0 0
        %1469 = vmatpush1.bf16.msra.mxu0 0
        %1470 = vmatprep.subr.bf16.mxu0 0
        %1471 = vmatpush1.bf16.msra.mxu0 0
        %1472 = vmatprep.mubr.bf16.mxu0 0
        %1473 = vmatmul.mubr.bf16.gmra.mrb[0].mxu0 %v1368
        %v1474 = vpop.f32.mrb[0].mxu0
        %v1475 = vadd.f32 %v1390, %v1474
        %v1476 = vpop.f32.mrb[0].mxu0
        %v1477 = vpop.f32.mrb[0].mxu0
        %v1478 = vpop.f32.mrb[0].mxu0
        %1479 = vdwg.mxu0
        %v1480 = vadd.f32 %v1262, %v1475
        %1481 = vst.msk [vmem:[%s613] sm:$0xff] %vm618, %v1480
        %s1482 = sand.u32 %s322, 1
        %s1483 = scalar_lea.sflag [#allocation5], %s1482
        %s1484 = sand.u32 %s322, 1
        %s1485 = smul.addr %s1484, 8
        %s1486 = scalar_lea.vmem [#allocation24], %s1485
        // Predicated region
        $region125: #{tpu_custom_call.1} parent=71 // pred_check
          %p1487 = pneg %p332
        $region126: #{tpu_custom_call.1} parent=71 // pred_check_branch
          %1489 = sbr.rel (%p1487) target = $region128
        $region127: #{tpu_custom_call.1} parent=71 // pred_region
          %s1491 = ssub.s32 128, 128
          %1492 = vsyncadd %s1483, %s1491
          %s1493 = smul.addr %s36, 128
          %s1494 = scalar_lea.hbm %s13, %s1493
          %s1496 = sshll.u32 %s1486, 4
          %s1497 = int_to_ptr.vmem [resolvable:$true] %s1496
          %1499 = dma.vmem_to_hbm [thread:$0]  %s1497, 128, %s1494, %s1483
        $region128: #{tpu_custom_call.1} parent=71 // pred_fallthru
          _
      $region72: #{tpu_custom_call.1} parent=5 // pred_fallthru
        _
      %p1500 = scmp.le.s32.totalorder 2, %s31
      // Predicated region
      $region129: #{tpu_custom_call.1} parent=5 // pred_check
        %p1501 = pneg %p1500
      $region130: #{tpu_custom_call.1} parent=5 // pred_check_branch
        %1503 = sbr.rel (%p1501) target = $region132
      $region131: #{tpu_custom_call.1} parent=5 // pred_region
        %s1504 = ssub.s32 %s31, 2
        // Predicated region
        $region133: #{tpu_custom_call.1} parent=131 // pred_check
          %p1505 = pneg %p338
        $region134: #{tpu_custom_call.1} parent=131 // pred_check_branch
          %1507 = sbr.rel (%p1505) target = $region136
        $region135: #{tpu_custom_call.1} parent=131 // pred_region
          %s1508 = sand.u32 %s323, 1
          %s1509 = scalar_lea.sflag [#allocation5], %s1508
          %s1510 = sand.u32 %s323, 1
          %s1511 = smul.addr %s1510, 8
          %s1512 = scalar_lea.vmem [#allocation24], %s1511
          %1513 = dma.done %s1509, 128
        $region136: #{tpu_custom_call.1} parent=131 // pred_fallthru
          _
      $region132: #{tpu_custom_call.1} parent=5 // pred_fallthru
        _
    $region6: #{tpu_custom_call.1} parent=1 // loop_footer
      %s35 = sadd.s32 1, %s31
    $region7: #{tpu_custom_call.1} parent=1 // loop_footer_branch
      %30 = sbr.rel target = $region3
    $region8: #{tpu_custom_call.1} parent=1 // loop_exit
      _
    %1514 = vsyncpa [#allocation4], 1
    %s1515 = scalar_lea.sflag [#allocation4], 1
    %1516 = vsyncpa %s1515, 1
    %1517 = vsyncpa [#allocation7], 1
    %1518 = vsyncpa [#allocation10], 1
    %1519 = vsyncpa [#allocation13], 1
    %1520 = vsyncpa [#allocation16], 1
    %1521 = vsyncpa [#allocation19], 1
    %1522 = vsyncpa [#allocation22], 1
    %1523 = vsyncpa [#allocation5], 1
    %s1524 = scalar_lea.sflag [#allocation5], 1
    %1525 = vsyncpa %s1524, 1

</llo_original>
